<compile_context>
chip_gen: v7x
topology: tpu7x:2x2x1
jax: 0.10.0
libtpu: 0.0.40
codegen_flags: <defaults>
</compile_context>

<pallas_src>
import functools

import jax
import jax.numpy as jnp
import numpy as np
from jax import lax
from jax.experimental import pallas as pl
from jax.experimental.pallas import tpu as pltpu

EPS = 1e-5
NEG_SLOPE = 0.2


def _leaky_relu(z):
    return jnp.where(z > 0, z, NEG_SLOPE * z)


def _conv_bn_lrelu(act, w_ref, g_ref, b_ref, masks_ref, pad_ref, col_ref,
                   *, W, PAD):
    """Conv3x3(s=1,p=1,no bias) + BatchNorm2d(train stats) + LeakyReLU(0.2).

    act        : (Cin, NHW) activation value, channel-major (lane-dense).
    w_ref      : (Cout, 9*Cmax) im2col weight matrix (unused rows zero-padded).
    g_ref/b_ref: (Cout, 1) BN affine params.
    masks_ref  : (9, NHW) float border-validity mask per tap.
    pad_ref    : (Cmax, NHW + 2*PAD) staging buffer; halo columns stay zero.
    col_ref    : (9*Cmax, NHW) im2col staging buffer; unused rows stay zero
                 (or hold finite stale data whose weight rows are zero).
    """
    cin, nhw = act.shape
    cmax = col_ref.shape[0] // 9

    # Stage the activation.  Only the interior [PAD, PAD+NHW) is rewritten, so
    # the zero halo written once at kernel entry remains valid for every conv.
    pad_ref[:cin, PAD:PAD + nhw] = act

    # Build the im2col operand: 9 statically shifted copies (one per tap),
    # zeroed outside the image / batch borders.  Shifts are static lane
    # offsets; stores land at sublane offsets that are multiples of cmax.
    t = 0
    for dy in (-1, 0, 1):
        for dx in (-1, 0, 1):
            off = dy * W + dx
            slab = pad_ref[:cin, PAD + off:PAD + off + nhw]
            if not (dy == 0 and dx == 0):
                # Mask kills (a) out-of-image taps, (b) row-wrap / batch-wrap
                # artefacts of the flattened layout.  Center tap needs none.
                slab = slab * masks_ref[t:t + 1, :]
            col_ref[t * cmax:t * cmax + cin, :] = slab
            t += 1

    # One MXU matmul for the whole conv.
    y = jnp.dot(w_ref[...], col_ref[...], preferred_element_type=jnp.float32)

    # Fused BN (batch stats over N*H*W, biased variance) + LeakyReLU.
    inv_n = 1.0 / nhw
    mean = jnp.sum(y, axis=1, keepdims=True) * inv_n
    var = jnp.sum(y * y, axis=1, keepdims=True) * inv_n - mean * mean
    scale = g_ref[...] * lax.rsqrt(var + EPS)
    shift = b_ref[...] - mean * scale
    return _leaky_relu(y * scale + shift)


def _unet_down_kernel(x_ref, masks_ref,
                      w1_ref, g1_ref, b1_ref,
                      w2_ref, g2_ref, b2_ref,
                      w3_ref, g3_ref, b3_ref,
                      o_ref, pad_ref, col_ref, *, W, PAD):
    # Zero the staging buffers ONCE (hoisted out of the per-conv path):
    #  - pad_ref: the halo columns must stay zero across all three convs; only
    #    the interior slice is ever rewritten (see _conv_bn_lrelu).
    #  - col_ref: per-tap rows beyond the current Cin are not rewritten by the
    #    4-input-channel convs; they must hold finite values (their weight
    #    rows are zero, so they contribute nothing to the matmul).
    pad_ref[...] = jnp.zeros(pad_ref.shape, jnp.float32)
    col_ref[...] = jnp.zeros(col_ref.shape, jnp.float32)

    conv = functools.partial(_conv_bn_lrelu, masks_ref=masks_ref,
                             pad_ref=pad_ref, col_ref=col_ref, W=W, PAD=PAD)
    h = conv(x_ref[...], w1_ref, g1_ref, b1_ref)   # conv1 + BN1 + LeakyReLU
    h = conv(h, w2_ref, g2_ref, b2_ref)            # conv2 + BN2 + LeakyReLU
    h = conv(h, w3_ref, g3_ref, b3_ref)            # conv3 + BN3 + l1 LeakyReLU
    # Shortcut branch intentionally omitted: `out.add(out2)` is out-of-place
    # in the PyTorch forward, so its result never reaches the output.
    o_ref[...] = h                                 # (Cout, NHW): lane-dense store


def unet_down_1(x_nchw, params):
    """UNetDown_1 forward.  NCHW in/out like PyTorch; kernel runs channel-major."""
    N, Cin, H, W = x_nchw.shape
    Cout = params["w1"].shape[-1]
    NHW = N * H * W
    Cmax = max(Cin, Cout)
    PAD = 128  # lane-aligned halo: center-tap slice starts on a lane boundary

    x_flat = jnp.transpose(x_nchw, (1, 0, 2, 3)).reshape(Cin, NHW).astype(jnp.float32)

    def to_mat(w_hwio):
        # HWIO (3,3,ci,co) -> (co, 9*Cmax), tap-major / channel-minor, with the
        # unused channel rows (ci..Cmax) of every tap zero-padded.
        ci, co = w_hwio.shape[2], w_hwio.shape[3]
        w = jnp.transpose(w_hwio, (3, 0, 1, 2)).reshape(co, 9, ci)
        w = jnp.pad(w, ((0, 0), (0, 0), (0, Cmax - ci)))
        return w.reshape(co, 9 * Cmax).astype(jnp.float32)

    # Border-validity mask for every tap (dy, dx), precomputed in the wrapper
    # (lane index -> (h, w) coordinate of the output pixel).  Shared by all
    # three convs, so it is built once and DMA'd once.
    idx = jnp.arange(NHW, dtype=jnp.int32)
    hc = (idx // W) % H
    wc = idx % W
    rows = []
    for dy in (-1, 0, 1):
        for dx in (-1, 0, 1):
            ok = (hc + dy >= 0) & (hc + dy < H) & (wc + dx >= 0) & (wc + dx < W)
            rows.append(ok.astype(jnp.float32))
    masks = jnp.stack(rows, axis=0)  # (9, NHW)

    args = (x_flat, masks,
            to_mat(params["w1"]),
            params["g1"].reshape(Cout, 1).astype(jnp.float32),
            params["b1"].reshape(Cout, 1).astype(jnp.float32),
            to_mat(params["w2"]),
            params["g2"].reshape(Cin, 1).astype(jnp.float32),
            params["b2"].reshape(Cin, 1).astype(jnp.float32),
            to_mat(params["w3"]),
            params["g3"].reshape(Cout, 1).astype(jnp.float32),
            params["b3"].reshape(Cout, 1).astype(jnp.float32))

    vmem = pl.BlockSpec(memory_space=pltpu.MemorySpace.VMEM)
    # TODO(synk): at production N/H/W, BN batch statistics couple all pixels,
    # so a parallel grid needs a cross-step stats reduction; at this toy size
    # a single program avoids per-step grid overhead (~0.35us/step).
    out_flat = pl.pallas_call(
        functools.partial(_unet_down_kernel, W=W, PAD=PAD),
        out_shape=jax.ShapeDtypeStruct((Cout, NHW), jnp.float32),
        in_specs=[vmem] * len(args),
        out_specs=vmem,
        scratch_shapes=[
            pltpu.VMEM((Cmax, NHW + 2 * PAD), jnp.float32),  # zero-haloed staging
            pltpu.VMEM((9 * Cmax, NHW), jnp.float32),        # im2col operand
        ],
    )(*args)
    return jnp.transpose(out_flat.reshape(Cout, N, H, W), (1, 0, 2, 3))


def _reference(x_nchw, p):
    """Pure-JAX reference mirroring the PyTorch forward (NHWC internally)."""
    x = jnp.transpose(x_nchw, (0, 2, 3, 1)).astype(jnp.float32)

    def conv(a, w):
        return jax.lax.conv_general_dilated(
            a, w, window_strides=(1, 1), padding="SAME",
            dimension_numbers=("NHWC", "HWIO", "NHWC"))

    def bn(a, g, b):
        m = jnp.mean(a, axis=(0, 1, 2), keepdims=True)
        v = jnp.mean(jnp.square(a - m), axis=(0, 1, 2), keepdims=True)
        return (a - m) / jnp.sqrt(v + EPS) * g.reshape(1, 1, 1, -1) + b.reshape(1, 1, 1, -1)

    h = _leaky_relu(bn(conv(x, p["w1"]), p["g1"], p["b1"]))
    h = _leaky_relu(bn(conv(h, p["w2"]), p["g2"], p["b2"]))
    h = bn(conv(h, p["w3"]), p["g3"], p["b3"])
    return jnp.transpose(_leaky_relu(h), (0, 3, 1, 2))


if __name__ == "__main__":
    key = jax.random.PRNGKey(0)
    N, in_size, out_size, H, W = 2, 4, 8, 16, 16
    ks = jax.random.split(key, 8)

    # Deterministic synthetic parameters (shapes per the module __init__).
    # Conv weights kept in HWIO = PyTorch OIHW transposed (2, 3, 1, 0).
    params = {
        "w1": 0.1 * jax.random.normal(ks[0], (3, 3, in_size, out_size), jnp.float32),
        "w2": 0.1 * jax.random.normal(ks[1], (3, 3, out_size, in_size), jnp.float32),
        "w3": 0.1 * jax.random.normal(ks[2], (3, 3, in_size, out_size), jnp.float32),
        "g1": 1.0 + 0.1 * jax.random.normal(ks[3], (1, out_size), jnp.float32),
        "b1": 0.1 * jax.random.normal(ks[4], (1, out_size), jnp.float32),
        "g2": 1.0 + 0.1 * jax.random.normal(ks[5], (1, in_size), jnp.float32),
        "b2": 0.1 * jax.random.normal(ks[6], (1, in_size), jnp.float32),
        "g3": jnp.ones((1, out_size), jnp.float32),   # PyTorch BN default affine init
        "b3": jnp.zeros((1, out_size), jnp.float32),
    }
    x = jax.random.normal(ks[7], (N, in_size, H, W), jnp.float32)  # NCHW like PyTorch

    out = jax.block_until_ready(unet_down_1(x, params))
    ref = jax.block_until_ready(_reference(x, params))
    assert out.shape == (N, out_size, H, W)
    np.testing.assert_allclose(np.asarray(out), np.asarray(ref), atol=5e-2, rtol=5e-2)
    print("KERNEL_OK")
</pallas_src>

<mosaic_0001>
module attributes {stable_mosaic.version = 11 : i64} {
  func.func @_unet_down_kernel(%arg0: memref<4x512xf32, #tpu.memory_space<vmem>>, %arg1: memref<9x512xf32, #tpu.memory_space<vmem>>, %arg2: memref<8x72xf32, #tpu.memory_space<vmem>>, %arg3: memref<8x1xf32, #tpu.memory_space<vmem>>, %arg4: memref<8x1xf32, #tpu.memory_space<vmem>>, %arg5: memref<4x72xf32, #tpu.memory_space<vmem>>, %arg6: memref<4x1xf32, #tpu.memory_space<vmem>>, %arg7: memref<4x1xf32, #tpu.memory_space<vmem>>, %arg8: memref<8x72xf32, #tpu.memory_space<vmem>>, %arg9: memref<8x1xf32, #tpu.memory_space<vmem>>, %arg10: memref<8x1xf32, #tpu.memory_space<vmem>>, %arg11: memref<8x512xf32, #tpu.memory_space<vmem>>, %arg12: memref<8x768xf32, #tpu.memory_space<vmem>>, %arg13: memref<72x512xf32, #tpu.memory_space<vmem>>) attributes {dimension_semantics = [], scalar_prefetch = 0 : i64, scratch_operands = 2 : i64, tpu.core_type = #tpu.core_type<tc>} {
    %cst = arith.constant 0.000000e+00 : f32
    %0 = vector.broadcast %cst : f32 to vector<8x768xf32>
    %c0 = arith.constant 0 : index
    %c0_0 = arith.constant 0 : index
    %1 = vector.load %arg12[%c0, %c0_0] : memref<8x768xf32, #tpu.memory_space<vmem>>, vector<8x768xf32>
    tpu.vector_store %arg12[%c0, %c0_0], %0 {strides = array<i32>} : memref<8x768xf32, #tpu.memory_space<vmem>>, vector<8x768xf32>,
    %cst_1 = arith.constant 0.000000e+00 : f32
    %2 = vector.broadcast %cst_1 : f32 to vector<72x512xf32>
    %c0_2 = arith.constant 0 : index
    %c0_3 = arith.constant 0 : index
    %3 = vector.load %arg13[%c0_2, %c0_3] : memref<72x512xf32, #tpu.memory_space<vmem>>, vector<72x512xf32>
    tpu.vector_store %arg13[%c0_2, %c0_3], %2 {strides = array<i32>} : memref<72x512xf32, #tpu.memory_space<vmem>>, vector<72x512xf32>,
    %c0_4 = arith.constant 0 : index
    %c0_5 = arith.constant 0 : index
    %4 = vector.load %arg0[%c0_4, %c0_5] : memref<4x512xf32, #tpu.memory_space<vmem>>, vector<4x512xf32>
    %c0_6 = arith.constant 0 : index
    %c128 = arith.constant 128 : index
    %5 = vector.load %arg12[%c0_6, %c128] : memref<8x768xf32, #tpu.memory_space<vmem>>, vector<4x512xf32>
    tpu.vector_store %arg12[%c0_6, %c128], %4 {strides = array<i32>} : memref<8x768xf32, #tpu.memory_space<vmem>>, vector<4x512xf32>,
    %c0_7 = arith.constant 0 : index
    %c111 = arith.constant 111 : index
    %6 = vector.load %arg12[%c0_7, %c111] : memref<8x768xf32, #tpu.memory_space<vmem>>, vector<4x512xf32>
    %c0_8 = arith.constant 0 : index
    %c0_9 = arith.constant 0 : index
    %7 = vector.load %arg1[%c0_8, %c0_9] : memref<9x512xf32, #tpu.memory_space<vmem>>, vector<1x512xf32>
    %8 = vector.broadcast %7 : vector<1x512xf32> to vector<4x512xf32>
    %9 = arith.mulf %6, %8 : vector<4x512xf32>
    %c0_10 = arith.constant 0 : index
    %c0_11 = arith.constant 0 : index
    %10 = vector.load %arg13[%c0_10, %c0_11] : memref<72x512xf32, #tpu.memory_space<vmem>>, vector<4x512xf32>
    tpu.vector_store %arg13[%c0_10, %c0_11], %9 {strides = array<i32>} : memref<72x512xf32, #tpu.memory_space<vmem>>, vector<4x512xf32>,
    %c0_12 = arith.constant 0 : index
    %c112 = arith.constant 112 : index
    %11 = vector.load %arg12[%c0_12, %c112] : memref<8x768xf32, #tpu.memory_space<vmem>>, vector<4x512xf32>
    %c1 = arith.constant 1 : index
    %c0_13 = arith.constant 0 : index
    %12 = vector.load %arg1[%c1, %c0_13] : memref<9x512xf32, #tpu.memory_space<vmem>>, vector<1x512xf32>
    %13 = vector.broadcast %12 : vector<1x512xf32> to vector<4x512xf32>
    %14 = arith.mulf %11, %13 : vector<4x512xf32>
    %c8 = arith.constant 8 : index
    %c0_14 = arith.constant 0 : index
    %15 = vector.load %arg13[%c8, %c0_14] : memref<72x512xf32, #tpu.memory_space<vmem>>, vector<4x512xf32>
    tpu.vector_store %arg13[%c8, %c0_14], %14 {strides = array<i32>} : memref<72x512xf32, #tpu.memory_space<vmem>>, vector<4x512xf32>,
    %c0_15 = arith.constant 0 : index
    %c113 = arith.constant 113 : index
    %16 = vector.load %arg12[%c0_15, %c113] : memref<8x768xf32, #tpu.memory_space<vmem>>, vector<4x512xf32>
    %c2 = arith.constant 2 : index
    %c0_16 = arith.constant 0 : index
    %17 = vector.load %arg1[%c2, %c0_16] : memref<9x512xf32, #tpu.memory_space<vmem>>, vector<1x512xf32>
    %18 = vector.broadcast %17 : vector<1x512xf32> to vector<4x512xf32>
    %19 = arith.mulf %16, %18 : vector<4x512xf32>
    %c16 = arith.constant 16 : index
    %c0_17 = arith.constant 0 : index
    %20 = vector.load %arg13[%c16, %c0_17] : memref<72x512xf32, #tpu.memory_space<vmem>>, vector<4x512xf32>
    tpu.vector_store %arg13[%c16, %c0_17], %19 {strides = array<i32>} : memref<72x512xf32, #tpu.memory_space<vmem>>, vector<4x512xf32>,
    %c0_18 = arith.constant 0 : index
    %c127 = arith.constant 127 : index
    %21 = vector.load %arg12[%c0_18, %c127] : memref<8x768xf32, #tpu.memory_space<vmem>>, vector<4x512xf32>
    %c3 = arith.constant 3 : index
    %c0_19 = arith.constant 0 : index
    %22 = vector.load %arg1[%c3, %c0_19] : memref<9x512xf32, #tpu.memory_space<vmem>>, vector<1x512xf32>
    %23 = vector.broadcast %22 : vector<1x512xf32> to vector<4x512xf32>
    %24 = arith.mulf %21, %23 : vector<4x512xf32>
    %c24 = arith.constant 24 : index
    %c0_20 = arith.constant 0 : index
    %25 = vector.load %arg13[%c24, %c0_20] : memref<72x512xf32, #tpu.memory_space<vmem>>, vector<4x512xf32>
    tpu.vector_store %arg13[%c24, %c0_20], %24 {strides = array<i32>} : memref<72x512xf32, #tpu.memory_space<vmem>>, vector<4x512xf32>,
    %c0_21 = arith.constant 0 : index
    %c128_22 = arith.constant 128 : index
    %26 = vector.load %arg12[%c0_21, %c128_22] : memref<8x768xf32, #tpu.memory_space<vmem>>, vector<4x512xf32>
    %c32 = arith.constant 32 : index
    %c0_23 = arith.constant 0 : index
    %27 = vector.load %arg13[%c32, %c0_23] : memref<72x512xf32, #tpu.memory_space<vmem>>, vector<4x512xf32>
    tpu.vector_store %arg13[%c32, %c0_23], %26 {strides = array<i32>} : memref<72x512xf32, #tpu.memory_space<vmem>>, vector<4x512xf32>,
    %c0_24 = arith.constant 0 : index
    %c129 = arith.constant 129 : index
    %28 = vector.load %arg12[%c0_24, %c129] : memref<8x768xf32, #tpu.memory_space<vmem>>, vector<4x512xf32>
    %c5 = arith.constant 5 : index
    %c0_25 = arith.constant 0 : index
    %29 = vector.load %arg1[%c5, %c0_25] : memref<9x512xf32, #tpu.memory_space<vmem>>, vector<1x512xf32>
    %30 = vector.broadcast %29 : vector<1x512xf32> to vector<4x512xf32>
    %31 = arith.mulf %28, %30 : vector<4x512xf32>
    %c40 = arith.constant 40 : index
    %c0_26 = arith.constant 0 : index
    %32 = vector.load %arg13[%c40, %c0_26] : memref<72x512xf32, #tpu.memory_space<vmem>>, vector<4x512xf32>
    tpu.vector_store %arg13[%c40, %c0_26], %31 {strides = array<i32>} : memref<72x512xf32, #tpu.memory_space<vmem>>, vector<4x512xf32>,
    %c0_27 = arith.constant 0 : index
    %c143 = arith.constant 143 : index
    %33 = vector.load %arg12[%c0_27, %c143] : memref<8x768xf32, #tpu.memory_space<vmem>>, vector<4x512xf32>
    %c6 = arith.constant 6 : index
    %c0_28 = arith.constant 0 : index
    %34 = vector.load %arg1[%c6, %c0_28] : memref<9x512xf32, #tpu.memory_space<vmem>>, vector<1x512xf32>
    %35 = vector.broadcast %34 : vector<1x512xf32> to vector<4x512xf32>
    %36 = arith.mulf %33, %35 : vector<4x512xf32>
    %c48 = arith.constant 48 : index
    %c0_29 = arith.constant 0 : index
    %37 = vector.load %arg13[%c48, %c0_29] : memref<72x512xf32, #tpu.memory_space<vmem>>, vector<4x512xf32>
    tpu.vector_store %arg13[%c48, %c0_29], %36 {strides = array<i32>} : memref<72x512xf32, #tpu.memory_space<vmem>>, vector<4x512xf32>,
    %c0_30 = arith.constant 0 : index
    %c144 = arith.constant 144 : index
    %38 = vector.load %arg12[%c0_30, %c144] : memref<8x768xf32, #tpu.memory_space<vmem>>, vector<4x512xf32>
    %c7 = arith.constant 7 : index
    %c0_31 = arith.constant 0 : index
    %39 = vector.load %arg1[%c7, %c0_31] : memref<9x512xf32, #tpu.memory_space<vmem>>, vector<1x512xf32>
    %40 = vector.broadcast %39 : vector<1x512xf32> to vector<4x512xf32>
    %41 = arith.mulf %38, %40 : vector<4x512xf32>
    %c56 = arith.constant 56 : index
    %c0_32 = arith.constant 0 : index
    %42 = vector.load %arg13[%c56, %c0_32] : memref<72x512xf32, #tpu.memory_space<vmem>>, vector<4x512xf32>
    tpu.vector_store %arg13[%c56, %c0_32], %41 {strides = array<i32>} : memref<72x512xf32, #tpu.memory_space<vmem>>, vector<4x512xf32>,
    %c0_33 = arith.constant 0 : index
    %c145 = arith.constant 145 : index
    %43 = vector.load %arg12[%c0_33, %c145] : memref<8x768xf32, #tpu.memory_space<vmem>>, vector<4x512xf32>
    %c8_34 = arith.constant 8 : index
    %c0_35 = arith.constant 0 : index
    %44 = vector.load %arg1[%c8_34, %c0_35] : memref<9x512xf32, #tpu.memory_space<vmem>>, vector<1x512xf32>
    %45 = vector.broadcast %44 : vector<1x512xf32> to vector<4x512xf32>
    %46 = arith.mulf %43, %45 : vector<4x512xf32>
    %c64 = arith.constant 64 : index
    %c0_36 = arith.constant 0 : index
    %47 = vector.load %arg13[%c64, %c0_36] : memref<72x512xf32, #tpu.memory_space<vmem>>, vector<4x512xf32>
    tpu.vector_store %arg13[%c64, %c0_36], %46 {strides = array<i32>} : memref<72x512xf32, #tpu.memory_space<vmem>>, vector<4x512xf32>,
    %c0_37 = arith.constant 0 : index
    %c0_38 = arith.constant 0 : index
    %48 = vector.load %arg2[%c0_37, %c0_38] : memref<8x72xf32, #tpu.memory_space<vmem>>, vector<8x72xf32>
    %c0_39 = arith.constant 0 : index
    %c0_40 = arith.constant 0 : index
    %49 = vector.load %arg13[%c0_39, %c0_40] : memref<72x512xf32, #tpu.memory_space<vmem>>, vector<72x512xf32>
    %cst_41 = arith.constant dense<0.000000e+00> : vector<8x512xf32>
    %50 = tpu.matmul %48, %49, %cst_41 {dimension_numbers = #tpu.dot_dimension_numbers<[1], [0], [0], [1], [0, 0, 1, 1], [], []>} : vector<8x72xf32>, vector<72x512xf32>, vector<8x512xf32> -> vector<8x512xf32>
    %cst_42 = arith.constant dense<0.000000e+00> : vector<8xf32>
    %51 = vector.multi_reduction <add>, %50, %cst_42 [1] : vector<8x512xf32> to vector<8xf32>
    %52 = vector.shape_cast %51 : vector<8xf32> to vector<8x1xf32>
    %cst_43 = arith.constant 0.001953125 : f32
    %53 = vector.broadcast %cst_43 : f32 to vector<8x1xf32>
    %54 = arith.mulf %52, %53 : vector<8x1xf32>
    %55 = arith.mulf %50, %50 : vector<8x512xf32>
    %cst_44 = arith.constant dense<0.000000e+00> : vector<8xf32>
    %56 = vector.multi_reduction <add>, %55, %cst_44 [1] : vector<8x512xf32> to vector<8xf32>
    %57 = vector.shape_cast %56 : vector<8xf32> to vector<8x1xf32>
    %cst_45 = arith.constant 0.001953125 : f32
    %58 = vector.broadcast %cst_45 : f32 to vector<8x1xf32>
    %59 = arith.mulf %57, %58 : vector<8x1xf32>
    %60 = arith.mulf %54, %54 : vector<8x1xf32>
    %61 = arith.subf %59, %60 : vector<8x1xf32>
    %c0_46 = arith.constant 0 : index
    %c0_47 = arith.constant 0 : index
    %62 = vector.load %arg3[%c0_46, %c0_47] : memref<8x1xf32, #tpu.memory_space<vmem>>, vector<8x1xf32>
    %cst_48 = arith.constant 9.99999974E-6 : f32
    %63 = vector.broadcast %cst_48 : f32 to vector<8x1xf32>
    %64 = arith.addf %61, %63 : vector<8x1xf32>
    %65 = math.rsqrt %64 : vector<8x1xf32>
    %66 = arith.mulf %62, %65 : vector<8x1xf32>
    %c0_49 = arith.constant 0 : index
    %c0_50 = arith.constant 0 : index
    %67 = vector.load %arg4[%c0_49, %c0_50] : memref<8x1xf32, #tpu.memory_space<vmem>>, vector<8x1xf32>
    %68 = arith.mulf %54, %66 : vector<8x1xf32>
    %69 = arith.subf %67, %68 : vector<8x1xf32>
    %70 = vector.broadcast %66 : vector<8x1xf32> to vector<8x512xf32>
    %71 = arith.mulf %50, %70 : vector<8x512xf32>
    %72 = vector.broadcast %69 : vector<8x1xf32> to vector<8x512xf32>
    %73 = arith.addf %71, %72 : vector<8x512xf32>
    %cst_51 = arith.constant 0.000000e+00 : f32
    %74 = vector.broadcast %cst_51 : f32 to vector<8x512xf32>
    %75 = arith.cmpf ogt, %73, %74 : vector<8x512xf32>
    %cst_52 = arith.constant 2.000000e-01 : f32
    %76 = vector.broadcast %cst_52 : f32 to vector<8x512xf32>
    %77 = arith.mulf %76, %73 : vector<8x512xf32>
    %78 = arith.select %75, %73, %77 : vector<8x512xi1>, vector<8x512xf32>
    %c0_53 = arith.constant 0 : index
    %c128_54 = arith.constant 128 : index
    %79 = vector.load %arg12[%c0_53, %c128_54] : memref<8x768xf32, #tpu.memory_space<vmem>>, vector<8x512xf32>
    tpu.vector_store %arg12[%c0_53, %c128_54], %78 {strides = array<i32>} : memref<8x768xf32, #tpu.memory_space<vmem>>, vector<8x512xf32>,
    %c0_55 = arith.constant 0 : index
    %c111_56 = arith.constant 111 : index
    %80 = vector.load %arg12[%c0_55, %c111_56] : memref<8x768xf32, #tpu.memory_space<vmem>>, vector<8x512xf32>
    %c0_57 = arith.constant 0 : index
    %c0_58 = arith.constant 0 : index
    %81 = vector.load %arg1[%c0_57, %c0_58] : memref<9x512xf32, #tpu.memory_space<vmem>>, vector<1x512xf32>
    %82 = vector.broadcast %81 : vector<1x512xf32> to vector<8x512xf32>
    %83 = arith.mulf %80, %82 : vector<8x512xf32>
    %c0_59 = arith.constant 0 : index
    %c0_60 = arith.constant 0 : index
    %84 = vector.load %arg13[%c0_59, %c0_60] : memref<72x512xf32, #tpu.memory_space<vmem>>, vector<8x512xf32>
    tpu.vector_store %arg13[%c0_59, %c0_60], %83 {strides = array<i32>} : memref<72x512xf32, #tpu.memory_space<vmem>>, vector<8x512xf32>,
    %c0_61 = arith.constant 0 : index
    %c112_62 = arith.constant 112 : index
    %85 = vector.load %arg12[%c0_61, %c112_62] : memref<8x768xf32, #tpu.memory_space<vmem>>, vector<8x512xf32>
    %c1_63 = arith.constant 1 : index
    %c0_64 = arith.constant 0 : index
    %86 = vector.load %arg1[%c1_63, %c0_64] : memref<9x512xf32, #tpu.memory_space<vmem>>, vector<1x512xf32>
    %87 = vector.broadcast %86 : vector<1x512xf32> to vector<8x512xf32>
    %88 = arith.mulf %85, %87 : vector<8x512xf32>
    %c8_65 = arith.constant 8 : index
    %c0_66 = arith.constant 0 : index
    %89 = vector.load %arg13[%c8_65, %c0_66] : memref<72x512xf32, #tpu.memory_space<vmem>>, vector<8x512xf32>
    tpu.vector_store %arg13[%c8_65, %c0_66], %88 {strides = array<i32>} : memref<72x512xf32, #tpu.memory_space<vmem>>, vector<8x512xf32>,
    %c0_67 = arith.constant 0 : index
    %c113_68 = arith.constant 113 : index
    %90 = vector.load %arg12[%c0_67, %c113_68] : memref<8x768xf32, #tpu.memory_space<vmem>>, vector<8x512xf32>
    %c2_69 = arith.constant 2 : index
    %c0_70 = arith.constant 0 : index
    %91 = vector.load %arg1[%c2_69, %c0_70] : memref<9x512xf32, #tpu.memory_space<vmem>>, vector<1x512xf32>
    %92 = vector.broadcast %91 : vector<1x512xf32> to vector<8x512xf32>
    %93 = arith.mulf %90, %92 : vector<8x512xf32>
    %c16_71 = arith.constant 16 : index
    %c0_72 = arith.constant 0 : index
    %94 = vector.load %arg13[%c16_71, %c0_72] : memref<72x512xf32, #tpu.memory_space<vmem>>, vector<8x512xf32>
    tpu.vector_store %arg13[%c16_71, %c0_72], %93 {strides = array<i32>} : memref<72x512xf32, #tpu.memory_space<vmem>>, vector<8x512xf32>,
    %c0_73 = arith.constant 0 : index
    %c127_74 = arith.constant 127 : index
    %95 = vector.load %arg12[%c0_73, %c127_74] : memref<8x768xf32, #tpu.memory_space<vmem>>, vector<8x512xf32>
    %c3_75 = arith.constant 3 : index
    %c0_76 = arith.constant 0 : index
    %96 = vector.load %arg1[%c3_75, %c0_76] : memref<9x512xf32, #tpu.memory_space<vmem>>, vector<1x512xf32>
    %97 = vector.broadcast %96 : vector<1x512xf32> to vector<8x512xf32>
    %98 = arith.mulf %95, %97 : vector<8x512xf32>
    %c24_77 = arith.constant 24 : index
    %c0_78 = arith.constant 0 : index
    %99 = vector.load %arg13[%c24_77, %c0_78] : memref<72x512xf32, #tpu.memory_space<vmem>>, vector<8x512xf32>
    tpu.vector_store %arg13[%c24_77, %c0_78], %98 {strides = array<i32>} : memref<72x512xf32, #tpu.memory_space<vmem>>, vector<8x512xf32>,
    %c0_79 = arith.constant 0 : index
    %c128_80 = arith.constant 128 : index
    %100 = vector.load %arg12[%c0_79, %c128_80] : memref<8x768xf32, #tpu.memory_space<vmem>>, vector<8x512xf32>
    %c32_81 = arith.constant 32 : index
    %c0_82 = arith.constant 0 : index
    %101 = vector.load %arg13[%c32_81, %c0_82] : memref<72x512xf32, #tpu.memory_space<vmem>>, vector<8x512xf32>
    tpu.vector_store %arg13[%c32_81, %c0_82], %100 {strides = array<i32>} : memref<72x512xf32, #tpu.memory_space<vmem>>, vector<8x512xf32>,
    %c0_83 = arith.constant 0 : index
    %c129_84 = arith.constant 129 : index
    %102 = vector.load %arg12[%c0_83, %c129_84] : memref<8x768xf32, #tpu.memory_space<vmem>>, vector<8x512xf32>
    %c5_85 = arith.constant 5 : index
    %c0_86 = arith.constant 0 : index
    %103 = vector.load %arg1[%c5_85, %c0_86] : memref<9x512xf32, #tpu.memory_space<vmem>>, vector<1x512xf32>
    %104 = vector.broadcast %103 : vector<1x512xf32> to vector<8x512xf32>
    %105 = arith.mulf %102, %104 : vector<8x512xf32>
    %c40_87 = arith.constant 40 : index
    %c0_88 = arith.constant 0 : index
    %106 = vector.load %arg13[%c40_87, %c0_88] : memref<72x512xf32, #tpu.memory_space<vmem>>, vector<8x512xf32>
    tpu.vector_store %arg13[%c40_87, %c0_88], %105 {strides = array<i32>} : memref<72x512xf32, #tpu.memory_space<vmem>>, vector<8x512xf32>,
    %c0_89 = arith.constant 0 : index
    %c143_90 = arith.constant 143 : index
    %107 = vector.load %arg12[%c0_89, %c143_90] : memref<8x768xf32, #tpu.memory_space<vmem>>, vector<8x512xf32>
    %c6_91 = arith.constant 6 : index
    %c0_92 = arith.constant 0 : index
    %108 = vector.load %arg1[%c6_91, %c0_92] : memref<9x512xf32, #tpu.memory_space<vmem>>, vector<1x512xf32>
    %109 = vector.broadcast %108 : vector<1x512xf32> to vector<8x512xf32>
    %110 = arith.mulf %107, %109 : vector<8x512xf32>
    %c48_93 = arith.constant 48 : index
    %c0_94 = arith.constant 0 : index
    %111 = vector.load %arg13[%c48_93, %c0_94] : memref<72x512xf32, #tpu.memory_space<vmem>>, vector<8x512xf32>
    tpu.vector_store %arg13[%c48_93, %c0_94], %110 {strides = array<i32>} : memref<72x512xf32, #tpu.memory_space<vmem>>, vector<8x512xf32>,
    %c0_95 = arith.constant 0 : index
    %c144_96 = arith.constant 144 : index
    %112 = vector.load %arg12[%c0_95, %c144_96] : memref<8x768xf32, #tpu.memory_space<vmem>>, vector<8x512xf32>
    %c7_97 = arith.constant 7 : index
    %c0_98 = arith.constant 0 : index
    %113 = vector.load %arg1[%c7_97, %c0_98] : memref<9x512xf32, #tpu.memory_space<vmem>>, vector<1x512xf32>
    %114 = vector.broadcast %113 : vector<1x512xf32> to vector<8x512xf32>
    %115 = arith.mulf %112, %114 : vector<8x512xf32>
    %c56_99 = arith.constant 56 : index
    %c0_100 = arith.constant 0 : index
    %116 = vector.load %arg13[%c56_99, %c0_100] : memref<72x512xf32, #tpu.memory_space<vmem>>, vector<8x512xf32>
    tpu.vector_store %arg13[%c56_99, %c0_100], %115 {strides = array<i32>} : memref<72x512xf32, #tpu.memory_space<vmem>>, vector<8x512xf32>,
    %c0_101 = arith.constant 0 : index
    %c145_102 = arith.constant 145 : index
    %117 = vector.load %arg12[%c0_101, %c145_102] : memref<8x768xf32, #tpu.memory_space<vmem>>, vector<8x512xf32>
    %c8_103 = arith.constant 8 : index
    %c0_104 = arith.constant 0 : index
    %118 = vector.load %arg1[%c8_103, %c0_104] : memref<9x512xf32, #tpu.memory_space<vmem>>, vector<1x512xf32>
    %119 = vector.broadcast %118 : vector<1x512xf32> to vector<8x512xf32>
    %120 = arith.mulf %117, %119 : vector<8x512xf32>
    %c64_105 = arith.constant 64 : index
    %c0_106 = arith.constant 0 : index
    %121 = vector.load %arg13[%c64_105, %c0_106] : memref<72x512xf32, #tpu.memory_space<vmem>>, vector<8x512xf32>
    tpu.vector_store %arg13[%c64_105, %c0_106], %120 {strides = array<i32>} : memref<72x512xf32, #tpu.memory_space<vmem>>, vector<8x512xf32>,
    %c0_107 = arith.constant 0 : index
    %c0_108 = arith.constant 0 : index
    %122 = vector.load %arg5[%c0_107, %c0_108] : memref<4x72xf32, #tpu.memory_space<vmem>>, vector<4x72xf32>
    %c0_109 = arith.constant 0 : index
    %c0_110 = arith.constant 0 : index
    %123 = vector.load %arg13[%c0_109, %c0_110] : memref<72x512xf32, #tpu.memory_space<vmem>>, vector<72x512xf32>
    %cst_111 = arith.constant dense<0.000000e+00> : vector<4x512xf32>
    %124 = tpu.matmul %122, %123, %cst_111 {dimension_numbers = #tpu.dot_dimension_numbers<[1], [0], [0], [1], [0, 0, 1, 1], [], []>} : vector<4x72xf32>, vector<72x512xf32>, vector<4x512xf32> -> vector<4x512xf32>
    %cst_112 = arith.constant dense<0.000000e+00> : vector<4xf32>
    %125 = vector.multi_reduction <add>, %124, %cst_112 [1] : vector<4x512xf32> to vector<4xf32>
    %126 = vector.shape_cast %125 : vector<4xf32> to vector<4x1xf32>
    %cst_113 = arith.constant 0.001953125 : f32
    %127 = vector.broadcast %cst_113 : f32 to vector<4x1xf32>
    %128 = arith.mulf %126, %127 : vector<4x1xf32>
    %129 = arith.mulf %124, %124 : vector<4x512xf32>
    %cst_114 = arith.constant dense<0.000000e+00> : vector<4xf32>
    %130 = vector.multi_reduction <add>, %129, %cst_114 [1] : vector<4x512xf32> to vector<4xf32>
    %131 = vector.shape_cast %130 : vector<4xf32> to vector<4x1xf32>
    %cst_115 = arith.constant 0.001953125 : f32
    %132 = vector.broadcast %cst_115 : f32 to vector<4x1xf32>
    %133 = arith.mulf %131, %132 : vector<4x1xf32>
    %134 = arith.mulf %128, %128 : vector<4x1xf32>
    %135 = arith.subf %133, %134 : vector<4x1xf32>
    %c0_116 = arith.constant 0 : index
    %c0_117 = arith.constant 0 : index
    %136 = vector.load %arg6[%c0_116, %c0_117] : memref<4x1xf32, #tpu.memory_space<vmem>>, vector<4x1xf32>
    %cst_118 = arith.constant 9.99999974E-6 : f32
    %137 = vector.broadcast %cst_118 : f32 to vector<4x1xf32>
    %138 = arith.addf %135, %137 : vector<4x1xf32>
    %139 = math.rsqrt %138 : vector<4x1xf32>
    %140 = arith.mulf %136, %139 : vector<4x1xf32>
    %c0_119 = arith.constant 0 : index
    %c0_120 = arith.constant 0 : index
    %141 = vector.load %arg7[%c0_119, %c0_120] : memref<4x1xf32, #tpu.memory_space<vmem>>, vector<4x1xf32>
    %142 = arith.mulf %128, %140 : vector<4x1xf32>
    %143 = arith.subf %141, %142 : vector<4x1xf32>
    %144 = vector.broadcast %140 : vector<4x1xf32> to vector<4x512xf32>
    %145 = arith.mulf %124, %144 : vector<4x512xf32>
    %146 = vector.broadcast %143 : vector<4x1xf32> to vector<4x512xf32>
    %147 = arith.addf %145, %146 : vector<4x512xf32>
    %cst_121 = arith.constant 0.000000e+00 : f32
    %148 = vector.broadcast %cst_121 : f32 to vector<4x512xf32>
    %149 = arith.cmpf ogt, %147, %148 : vector<4x512xf32>
    %cst_122 = arith.constant 2.000000e-01 : f32
    %150 = vector.broadcast %cst_122 : f32 to vector<4x512xf32>
    %151 = arith.mulf %150, %147 : vector<4x512xf32>
    %152 = arith.select %149, %147, %151 : vector<4x512xi1>, vector<4x512xf32>
    %c0_123 = arith.constant 0 : index
    %c128_124 = arith.constant 128 : index
    %153 = vector.load %arg12[%c0_123, %c128_124] : memref<8x768xf32, #tpu.memory_space<vmem>>, vector<4x512xf32>
    tpu.vector_store %arg12[%c0_123, %c128_124], %152 {strides = array<i32>} : memref<8x768xf32, #tpu.memory_space<vmem>>, vector<4x512xf32>,
    %c0_125 = arith.constant 0 : index
    %c111_126 = arith.constant 111 : index
    %154 = vector.load %arg12[%c0_125, %c111_126] : memref<8x768xf32, #tpu.memory_space<vmem>>, vector<4x512xf32>
    %c0_127 = arith.constant 0 : index
    %c0_128 = arith.constant 0 : index
    %155 = vector.load %arg1[%c0_127, %c0_128] : memref<9x512xf32, #tpu.memory_space<vmem>>, vector<1x512xf32>
    %156 = vector.broadcast %155 : vector<1x512xf32> to vector<4x512xf32>
    %157 = arith.mulf %154, %156 : vector<4x512xf32>
    %c0_129 = arith.constant 0 : index
    %c0_130 = arith.constant 0 : index
    %158 = vector.load %arg13[%c0_129, %c0_130] : memref<72x512xf32, #tpu.memory_space<vmem>>, vector<4x512xf32>
    tpu.vector_store %arg13[%c0_129, %c0_130], %157 {strides = array<i32>} : memref<72x512xf32, #tpu.memory_space<vmem>>, vector<4x512xf32>,
    %c0_131 = arith.constant 0 : index
    %c112_132 = arith.constant 112 : index
    %159 = vector.load %arg12[%c0_131, %c112_132] : memref<8x768xf32, #tpu.memory_space<vmem>>, vector<4x512xf32>
    %c1_133 = arith.constant 1 : index
    %c0_134 = arith.constant 0 : index
    %160 = vector.load %arg1[%c1_133, %c0_134] : memref<9x512xf32, #tpu.memory_space<vmem>>, vector<1x512xf32>
    %161 = vector.broadcast %160 : vector<1x512xf32> to vector<4x512xf32>
    %162 = arith.mulf %159, %161 : vector<4x512xf32>
    %c8_135 = arith.constant 8 : index
    %c0_136 = arith.constant 0 : index
    %163 = vector.load %arg13[%c8_135, %c0_136] : memref<72x512xf32, #tpu.memory_space<vmem>>, vector<4x512xf32>
    tpu.vector_store %arg13[%c8_135, %c0_136], %162 {strides = array<i32>} : memref<72x512xf32, #tpu.memory_space<vmem>>, vector<4x512xf32>,
    %c0_137 = arith.constant 0 : index
    %c113_138 = arith.constant 113 : index
    %164 = vector.load %arg12[%c0_137, %c113_138] : memref<8x768xf32, #tpu.memory_space<vmem>>, vector<4x512xf32>
    %c2_139 = arith.constant 2 : index
    %c0_140 = arith.constant 0 : index
    %165 = vector.load %arg1[%c2_139, %c0_140] : memref<9x512xf32, #tpu.memory_space<vmem>>, vector<1x512xf32>
    %166 = vector.broadcast %165 : vector<1x512xf32> to vector<4x512xf32>
    %167 = arith.mulf %164, %166 : vector<4x512xf32>
    %c16_141 = arith.constant 16 : index
    %c0_142 = arith.constant 0 : index
    %168 = vector.load %arg13[%c16_141, %c0_142] : memref<72x512xf32, #tpu.memory_space<vmem>>, vector<4x512xf32>
    tpu.vector_store %arg13[%c16_141, %c0_142], %167 {strides = array<i32>} : memref<72x512xf32, #tpu.memory_space<vmem>>, vector<4x512xf32>,
    %c0_143 = arith.constant 0 : index
    %c127_144 = arith.constant 127 : index
    %169 = vector.load %arg12[%c0_143, %c127_144] : memref<8x768xf32, #tpu.memory_space<vmem>>, vector<4x512xf32>
    %c3_145 = arith.constant 3 : index
    %c0_146 = arith.constant 0 : index
    %170 = vector.load %arg1[%c3_145, %c0_146] : memref<9x512xf32, #tpu.memory_space<vmem>>, vector<1x512xf32>
    %171 = vector.broadcast %170 : vector<1x512xf32> to vector<4x512xf32>
    %172 = arith.mulf %169, %171 : vector<4x512xf32>
    %c24_147 = arith.constant 24 : index
    %c0_148 = arith.constant 0 : index
    %173 = vector.load %arg13[%c24_147, %c0_148] : memref<72x512xf32, #tpu.memory_space<vmem>>, vector<4x512xf32>
    tpu.vector_store %arg13[%c24_147, %c0_148], %172 {strides = array<i32>} : memref<72x512xf32, #tpu.memory_space<vmem>>, vector<4x512xf32>,
    %c0_149 = arith.constant 0 : index
    %c128_150 = arith.constant 128 : index
    %174 = vector.load %arg12[%c0_149, %c128_150] : memref<8x768xf32, #tpu.memory_space<vmem>>, vector<4x512xf32>
    %c32_151 = arith.constant 32 : index
    %c0_152 = arith.constant 0 : index
    %175 = vector.load %arg13[%c32_151, %c0_152] : memref<72x512xf32, #tpu.memory_space<vmem>>, vector<4x512xf32>
    tpu.vector_store %arg13[%c32_151, %c0_152], %174 {strides = array<i32>} : memref<72x512xf32, #tpu.memory_space<vmem>>, vector<4x512xf32>,
    %c0_153 = arith.constant 0 : index
    %c129_154 = arith.constant 129 : index
    %176 = vector.load %arg12[%c0_153, %c129_154] : memref<8x768xf32, #tpu.memory_space<vmem>>, vector<4x512xf32>
    %c5_155 = arith.constant 5 : index
    %c0_156 = arith.constant 0 : index
    %177 = vector.load %arg1[%c5_155, %c0_156] : memref<9x512xf32, #tpu.memory_space<vmem>>, vector<1x512xf32>
    %178 = vector.broadcast %177 : vector<1x512xf32> to vector<4x512xf32>
    %179 = arith.mulf %176, %178 : vector<4x512xf32>
    %c40_157 = arith.constant 40 : index
    %c0_158 = arith.constant 0 : index
    %180 = vector.load %arg13[%c40_157, %c0_158] : memref<72x512xf32, #tpu.memory_space<vmem>>, vector<4x512xf32>
    tpu.vector_store %arg13[%c40_157, %c0_158], %179 {strides = array<i32>} : memref<72x512xf32, #tpu.memory_space<vmem>>, vector<4x512xf32>,
    %c0_159 = arith.constant 0 : index
    %c143_160 = arith.constant 143 : index
    %181 = vector.load %arg12[%c0_159, %c143_160] : memref<8x768xf32, #tpu.memory_space<vmem>>, vector<4x512xf32>
    %c6_161 = arith.constant 6 : index
    %c0_162 = arith.constant 0 : index
    %182 = vector.load %arg1[%c6_161, %c0_162] : memref<9x512xf32, #tpu.memory_space<vmem>>, vector<1x512xf32>
    %183 = vector.broadcast %182 : vector<1x512xf32> to vector<4x512xf32>
    %184 = arith.mulf %181, %183 : vector<4x512xf32>
    %c48_163 = arith.constant 48 : index
    %c0_164 = arith.constant 0 : index
    %185 = vector.load %arg13[%c48_163, %c0_164] : memref<72x512xf32, #tpu.memory_space<vmem>>, vector<4x512xf32>
    tpu.vector_store %arg13[%c48_163, %c0_164], %184 {strides = array<i32>} : memref<72x512xf32, #tpu.memory_space<vmem>>, vector<4x512xf32>,
    %c0_165 = arith.constant 0 : index
    %c144_166 = arith.constant 144 : index
    %186 = vector.load %arg12[%c0_165, %c144_166] : memref<8x768xf32, #tpu.memory_space<vmem>>, vector<4x512xf32>
    %c7_167 = arith.constant 7 : index
    %c0_168 = arith.constant 0 : index
    %187 = vector.load %arg1[%c7_167, %c0_168] : memref<9x512xf32, #tpu.memory_space<vmem>>, vector<1x512xf32>
    %188 = vector.broadcast %187 : vector<1x512xf32> to vector<4x512xf32>
    %189 = arith.mulf %186, %188 : vector<4x512xf32>
    %c56_169 = arith.constant 56 : index
    %c0_170 = arith.constant 0 : index
    %190 = vector.load %arg13[%c56_169, %c0_170] : memref<72x512xf32, #tpu.memory_space<vmem>>, vector<4x512xf32>
    tpu.vector_store %arg13[%c56_169, %c0_170], %189 {strides = array<i32>} : memref<72x512xf32, #tpu.memory_space<vmem>>, vector<4x512xf32>,
    %c0_171 = arith.constant 0 : index
    %c145_172 = arith.constant 145 : index
    %191 = vector.load %arg12[%c0_171, %c145_172] : memref<8x768xf32, #tpu.memory_space<vmem>>, vector<4x512xf32>
    %c8_173 = arith.constant 8 : index
    %c0_174 = arith.constant 0 : index
    %192 = vector.load %arg1[%c8_173, %c0_174] : memref<9x512xf32, #tpu.memory_space<vmem>>, vector<1x512xf32>
    %193 = vector.broadcast %192 : vector<1x512xf32> to vector<4x512xf32>
    %194 = arith.mulf %191, %193 : vector<4x512xf32>
    %c64_175 = arith.constant 64 : index
    %c0_176 = arith.constant 0 : index
    %195 = vector.load %arg13[%c64_175, %c0_176] : memref<72x512xf32, #tpu.memory_space<vmem>>, vector<4x512xf32>
    tpu.vector_store %arg13[%c64_175, %c0_176], %194 {strides = array<i32>} : memref<72x512xf32, #tpu.memory_space<vmem>>, vector<4x512xf32>,
    %c0_177 = arith.constant 0 : index
    %c0_178 = arith.constant 0 : index
    %196 = vector.load %arg8[%c0_177, %c0_178] : memref<8x72xf32, #tpu.memory_space<vmem>>, vector<8x72xf32>
    %c0_179 = arith.constant 0 : index
    %c0_180 = arith.constant 0 : index
    %197 = vector.load %arg13[%c0_179, %c0_180] : memref<72x512xf32, #tpu.memory_space<vmem>>, vector<72x512xf32>
    %cst_181 = arith.constant dense<0.000000e+00> : vector<8x512xf32>
    %198 = tpu.matmul %196, %197, %cst_181 {dimension_numbers = #tpu.dot_dimension_numbers<[1], [0], [0], [1], [0, 0, 1, 1], [], []>} : vector<8x72xf32>, vector<72x512xf32>, vector<8x512xf32> -> vector<8x512xf32>
    %cst_182 = arith.constant dense<0.000000e+00> : vector<8xf32>
    %199 = vector.multi_reduction <add>, %198, %cst_182 [1] : vector<8x512xf32> to vector<8xf32>
    %200 = vector.shape_cast %199 : vector<8xf32> to vector<8x1xf32>
    %cst_183 = arith.constant 0.001953125 : f32
    %201 = vector.broadcast %cst_183 : f32 to vector<8x1xf32>
    %202 = arith.mulf %200, %201 : vector<8x1xf32>
    %203 = arith.mulf %198, %198 : vector<8x512xf32>
    %cst_184 = arith.constant dense<0.000000e+00> : vector<8xf32>
    %204 = vector.multi_reduction <add>, %203, %cst_184 [1] : vector<8x512xf32> to vector<8xf32>
    %205 = vector.shape_cast %204 : vector<8xf32> to vector<8x1xf32>
    %cst_185 = arith.constant 0.001953125 : f32
    %206 = vector.broadcast %cst_185 : f32 to vector<8x1xf32>
    %207 = arith.mulf %205, %206 : vector<8x1xf32>
    %208 = arith.mulf %202, %202 : vector<8x1xf32>
    %209 = arith.subf %207, %208 : vector<8x1xf32>
    %c0_186 = arith.constant 0 : index
    %c0_187 = arith.constant 0 : index
    %210 = vector.load %arg9[%c0_186, %c0_187] : memref<8x1xf32, #tpu.memory_space<vmem>>, vector<8x1xf32>
    %cst_188 = arith.constant 9.99999974E-6 : f32
    %211 = vector.broadcast %cst_188 : f32 to vector<8x1xf32>
    %212 = arith.addf %209, %211 : vector<8x1xf32>
    %213 = math.rsqrt %212 : vector<8x1xf32>
    %214 = arith.mulf %210, %213 : vector<8x1xf32>
    %c0_189 = arith.constant 0 : index
    %c0_190 = arith.constant 0 : index
    %215 = vector.load %arg10[%c0_189, %c0_190] : memref<8x1xf32, #tpu.memory_space<vmem>>, vector<8x1xf32>
    %216 = arith.mulf %202, %214 : vector<8x1xf32>
    %217 = arith.subf %215, %216 : vector<8x1xf32>
    %218 = vector.broadcast %214 : vector<8x1xf32> to vector<8x512xf32>
    %219 = arith.mulf %198, %218 : vector<8x512xf32>
    %220 = vector.broadcast %217 : vector<8x1xf32> to vector<8x512xf32>
    %221 = arith.addf %219, %220 : vector<8x512xf32>
    %cst_191 = arith.constant 0.000000e+00 : f32
    %222 = vector.broadcast %cst_191 : f32 to vector<8x512xf32>
    %223 = arith.cmpf ogt, %221, %222 : vector<8x512xf32>
    %cst_192 = arith.constant 2.000000e-01 : f32
    %224 = vector.broadcast %cst_192 : f32 to vector<8x512xf32>
    %225 = arith.mulf %224, %221 : vector<8x512xf32>
    %226 = arith.select %223, %221, %225 : vector<8x512xi1>, vector<8x512xf32>
    %c0_193 = arith.constant 0 : index
    %c0_194 = arith.constant 0 : index
    %227 = vector.load %arg11[%c0_193, %c0_194] : memref<8x512xf32, #tpu.memory_space<vmem>>, vector<8x512xf32>
    tpu.vector_store %arg11[%c0_193, %c0_194], %226 {strides = array<i32>} : memref<8x512xf32, #tpu.memory_space<vmem>>, vector<8x512xf32>,
    return
  }
}

</mosaic_0001>

<llo_original>
// kernel: tpu_custom_call.1
$region0: #{tpu_custom_call.1}
  #allocation0 [shape = 'u32[]', space=smem, size = 0x4, offset = 0x4, fixed_abs, tag = 'smem constant byte address 0x4 - core index']
  #allocation1 [shape = 'u32[144,128]{1,0:T(1,128)}', space=vmem, size = 0x12000, scoped, tag = 'internal scratch']
  #allocation2 [shape = 'f32[8,768]{1,0:T(8,128)}', space=vmem, size = 0x6000, scoped, tag = 'scratch operand']
  #allocation3 [shape = 'f32[72,512]{1,0:T(8,128)}', space=vmem, size = 0x24000, scoped, tag = 'scratch operand']
  %s0 = inlined_call_operand.vmem [shape: f32[4,512], index: 0, kind: input, shape index: {}]
  %s1 = inlined_call_operand.hbm [shape: f32[9,512], index: 1, kind: input, shape index: {}]
  %s2 = inlined_call_operand.vmem [shape: f32[8,72], index: 2, kind: input, shape index: {}]
  %s3 = inlined_call_operand.vmem [shape: f32[8,1], index: 3, kind: input, shape index: {}]
  %s4 = inlined_call_operand.vmem [shape: f32[8,1], index: 4, kind: input, shape index: {}]
  %s5 = inlined_call_operand.vmem [shape: f32[4,72], index: 5, kind: input, shape index: {}]
  %s6 = inlined_call_operand.vmem [shape: f32[4,1], index: 6, kind: input, shape index: {}]
  %s7 = inlined_call_operand.vmem [shape: f32[4,1], index: 7, kind: input, shape index: {}]
  %s8 = inlined_call_operand.vmem [shape: f32[8,72], index: 8, kind: input, shape index: {}]
  %s9 = inlined_call_operand.vmem [shape: f32[8,1], index: 9, kind: input, shape index: {}]
  %s10 = inlined_call_operand.vmem [shape: f32[8,1], index: 10, kind: input, shape index: {}]
  %s11 = inlined_call_operand.hbm [shape: f32[8,512], index: 11, kind: output, shape index: {}]
  %s12 = sld [smem:[#allocation0]]
  $region58: #{tpu_custom_call.1} parent=0
    _
  %s14 = ssub.s32 1, %s12
  %s15 = scalar_select 0, %s14, %s12
  $region1: #{tpu_custom_call.1} parent=0
    #allocation4 [shape = 'u8[32768]{0}', space=vmem, size = 0x8000, scoped, tag = 'input window, operand 1, single buffered']
    #allocation5 [shape = 's32[1]{0}', space=sflag, size = 0x4, scoped, tag = 'scoped memory for tpu_custom_call.1']
    #allocation6 [shape = 's32[1]{0}', space=sflag, size = 0x4, scoped, tag = 'scoped memory for tpu_custom_call.1']
    #allocation7 [shape = 'u8[16384]{0}', space=vmem, size = 0x4000, scoped, tag = 'output window, operand 0, single buffered']
    %16 = vsyncpa [#allocation5], 0
    %17 = vsyncpa [#allocation6], 0
    // Predicated region
    $region2: #{tpu_custom_call.1} parent=1 // pred_check
      _
    $region3: #{tpu_custom_call.1} parent=1 // pred_check_branch
      %19 = sbr.rel (0) target = $region5
    $region4: #{tpu_custom_call.1} parent=1 // pred_region
      _
    $region5: #{tpu_custom_call.1} parent=1 // pred_fallthru
      _
    // Predicated region
    $region6: #{tpu_custom_call.1} parent=1 // pred_check
      _
    $region7: #{tpu_custom_call.1} parent=1 // pred_check_branch
      %21 = sbr.rel (0) target = $region9
    $region8: #{tpu_custom_call.1} parent=1 // pred_region
      %s23 = ssub.s32 1024, 1024
      %24 = vsyncadd [#allocation5], %s23
      %s25 = sshll.u32 [#allocation4], 4
      %s26 = int_to_ptr.vmem [resolvable:$true] %s25
      %31 = dma.hbm_to_vmem [thread:$0]  %s1, 1024, %s26, [#allocation5], 512, 512, 32
    $region9: #{tpu_custom_call.1} parent=1 // pred_fallthru
      _
    // Predicated region
    $region10: #{tpu_custom_call.1} parent=1 // pred_check
      _
    $region11: #{tpu_custom_call.1} parent=1 // pred_check_branch
      %33 = sbr.rel (0) target = $region13
    $region12: #{tpu_custom_call.1} parent=1 // pred_region
      _
    $region13: #{tpu_custom_call.1} parent=1 // pred_fallthru
      _
    // Predicated region
    $region14: #{tpu_custom_call.1} parent=1 // pred_check
      _
    $region15: #{tpu_custom_call.1} parent=1 // pred_check_branch
      %35 = sbr.rel (0) target = $region17
    $region16: #{tpu_custom_call.1} parent=1 // pred_region
      _
    $region17: #{tpu_custom_call.1} parent=1 // pred_fallthru
      _
    // Predicated region
    $region18: #{tpu_custom_call.1} parent=1 // pred_check
      _
    $region19: #{tpu_custom_call.1} parent=1 // pred_check_branch
      %37 = sbr.rel (0) target = $region21
    $region20: #{tpu_custom_call.1} parent=1 // pred_region
      _
    $region21: #{tpu_custom_call.1} parent=1 // pred_fallthru
      _
    // Predicated region
    $region22: #{tpu_custom_call.1} parent=1 // pred_check
      _
    $region23: #{tpu_custom_call.1} parent=1 // pred_check_branch
      %39 = sbr.rel (0) target = $region25
    $region24: #{tpu_custom_call.1} parent=1 // pred_region
      _
    $region25: #{tpu_custom_call.1} parent=1 // pred_fallthru
      _
    // Predicated region
    $region26: #{tpu_custom_call.1} parent=1 // pred_check
      _
    $region27: #{tpu_custom_call.1} parent=1 // pred_check_branch
      %41 = sbr.rel (0) target = $region29
    $region28: #{tpu_custom_call.1} parent=1 // pred_region
      _
    $region29: #{tpu_custom_call.1} parent=1 // pred_fallthru
      _
    // Predicated region
    $region30: #{tpu_custom_call.1} parent=1 // pred_check
      _
    $region31: #{tpu_custom_call.1} parent=1 // pred_check_branch
      %43 = sbr.rel (0) target = $region33
    $region32: #{tpu_custom_call.1} parent=1 // pred_region
      _
    $region33: #{tpu_custom_call.1} parent=1 // pred_fallthru
      _
    // Predicated region
    $region34: #{tpu_custom_call.1} parent=1 // pred_check
      _
    $region35: #{tpu_custom_call.1} parent=1 // pred_check_branch
      %45 = sbr.rel (0) target = $region37
    $region36: #{tpu_custom_call.1} parent=1 // pred_region
      _
    $region37: #{tpu_custom_call.1} parent=1 // pred_fallthru
      _
    // Predicated region
    $region38: #{tpu_custom_call.1} parent=1 // pred_check
      _
    $region39: #{tpu_custom_call.1} parent=1 // pred_check_branch
      %47 = sbr.rel (0) target = $region41
    $region40: #{tpu_custom_call.1} parent=1 // pred_region
      _
    $region41: #{tpu_custom_call.1} parent=1 // pred_fallthru
      _
    // Predicated region
    $region42: #{tpu_custom_call.1} parent=1 // pred_check
      _
    $region43: #{tpu_custom_call.1} parent=1 // pred_check_branch
      %49 = sbr.rel (0) target = $region45
    $region44: #{tpu_custom_call.1} parent=1 // pred_region
      _
    $region45: #{tpu_custom_call.1} parent=1 // pred_fallthru
      _
    // Predicated region
    $region46: #{tpu_custom_call.1} parent=1 // pred_check
      _
    $region47: #{tpu_custom_call.1} parent=1 // pred_check_branch
      %51 = sbr.rel (0) target = $region49
    $region48: #{tpu_custom_call.1} parent=1 // pred_region
      %52 = dma.done [#allocation5], 1024
    $region49: #{tpu_custom_call.1} parent=1 // pred_fallthru
      _
    %53 = vst [vmem:[#allocation2] sm:$0xff] 0.0
    %54 = vst [vmem:[#allocation2 + $0x8] sm:$0xff] 0.0
    %55 = vst [vmem:[#allocation2 + $0x10] sm:$0xff] 0.0
    %56 = vst [vmem:[#allocation2 + $0x18] sm:$0xff] 0.0
    %57 = vst [vmem:[#allocation2 + $0x20] sm:$0xff] 0.0
    %58 = vst [vmem:[#allocation2 + $0x28] sm:$0xff] 0.0
    %59 = vst [vmem:[#allocation3] sm:$0xff] 0.0
    %60 = vst [vmem:[#allocation3 + $0x8] sm:$0xff] 0.0
    %61 = vst [vmem:[#allocation3 + $0x10] sm:$0xff] 0.0
    %62 = vst [vmem:[#allocation3 + $0x18] sm:$0xff] 0.0
    %63 = vst [vmem:[#allocation3 + $0x20] sm:$0xff] 0.0
    %64 = vst [vmem:[#allocation3 + $0x28] sm:$0xff] 0.0
    %65 = vst [vmem:[#allocation3 + $0x30] sm:$0xff] 0.0
    %66 = vst [vmem:[#allocation3 + $0x38] sm:$0xff] 0.0
    %67 = vst [vmem:[#allocation3 + $0x40] sm:$0xff] 0.0
    %68 = vst [vmem:[#allocation3 + $0x48] sm:$0xff] 0.0
    %69 = vst [vmem:[#allocation3 + $0x50] sm:$0xff] 0.0
    %70 = vst [vmem:[#allocation3 + $0x58] sm:$0xff] 0.0
    %71 = vst [vmem:[#allocation3 + $0x60] sm:$0xff] 0.0
    %72 = vst [vmem:[#allocation3 + $0x68] sm:$0xff] 0.0
    %73 = vst [vmem:[#allocation3 + $0x70] sm:$0xff] 0.0
    %74 = vst [vmem:[#allocation3 + $0x78] sm:$0xff] 0.0
    %75 = vst [vmem:[#allocation3 + $0x80] sm:$0xff] 0.0
    %76 = vst [vmem:[#allocation3 + $0x88] sm:$0xff] 0.0
    %77 = vst [vmem:[#allocation3 + $0x90] sm:$0xff] 0.0
    %78 = vst [vmem:[#allocation3 + $0x98] sm:$0xff] 0.0
    %79 = vst [vmem:[#allocation3 + $0xa0] sm:$0xff] 0.0
    %80 = vst [vmem:[#allocation3 + $0xa8] sm:$0xff] 0.0
    %81 = vst [vmem:[#allocation3 + $0xb0] sm:$0xff] 0.0
    %82 = vst [vmem:[#allocation3 + $0xb8] sm:$0xff] 0.0
    %83 = vst [vmem:[#allocation3 + $0xc0] sm:$0xff] 0.0
    %84 = vst [vmem:[#allocation3 + $0xc8] sm:$0xff] 0.0
    %85 = vst [vmem:[#allocation3 + $0xd0] sm:$0xff] 0.0
    %86 = vst [vmem:[#allocation3 + $0xd8] sm:$0xff] 0.0
    %87 = vst [vmem:[#allocation3 + $0xe0] sm:$0xff] 0.0
    %88 = vst [vmem:[#allocation3 + $0xe8] sm:$0xff] 0.0
    %89 = vst [vmem:[#allocation3 + $0xf0] sm:$0xff] 0.0
    %90 = vst [vmem:[#allocation3 + $0xf8] sm:$0xff] 0.0
    %91 = vst [vmem:[#allocation3 + $0x100] sm:$0xff] 0.0
    %92 = vst [vmem:[#allocation3 + $0x108] sm:$0xff] 0.0
    %93 = vst [vmem:[#allocation3 + $0x110] sm:$0xff] 0.0
    %94 = vst [vmem:[#allocation3 + $0x118] sm:$0xff] 0.0
    %v95 = vld [vmem:[%s0] sm:$0xff]
    %v96 = vld [vmem:[%s0 + $0x8] sm:$0xff]
    %v99 = vcombine.high %v95, %v95
    %v100 = vcombine.high %v96, %v96
    %103 = vst [vmem:[#allocation2 + $0x8] sm:$0xf] %v95
    %104 = vst [vmem:[#allocation2 + $0x10] sm:$0xf] %v99
    %105 = vst [vmem:[#allocation2 + $0x18] sm:$0xf] %v96
    %106 = vst [vmem:[#allocation2 + $0x20] sm:$0xf] %v100
    %v107 = vld [vmem:[#allocation2] sm:$0xf]
    %v108 = vld [vmem:[#allocation2 + $0x8] sm:$0xf]
    %v109 = vld [vmem:[#allocation2 + $0x10] sm:$0xf]
    %v110 = vld [vmem:[#allocation2 + $0x18] sm:$0xf]
    %v111 = vld [vmem:[#allocation2 + $0x20] sm:$0xf]
    %v112 = vld [vmem:[#allocation4] ss:$8 sm:$0xf]
    %v114 = vlaneseq
    %v115 = vshrl.u32 %v114, 7
    %v116 = vsub.s32 0, %v115
    %v117 = vrot.slane %v112, %v116
    %v118 = vlaneseq
    %v119 = vshrl.u32 %v118, 7
    %v120 = vsub.s32 1, %v119
    %v121 = vrot.slane %v112, %v120
    %v122 = vlaneseq
    %v123 = vshrl.u32 %v122, 7
    %v124 = vsub.s32 2, %v123
    %v125 = vrot.slane %v112, %v124
    %v126 = vlaneseq
    %v127 = vshrl.u32 %v126, 7
    %v128 = vsub.s32 3, %v127
    %v129 = vrot.slane %v112, %v128
    %130 = vrot.lane.b32.xlu0 %v117, 111
    %v131 = vpop.permute.xlu0 %130
    %132 = vrot.lane.b32.xlu0 %v121, 111
    %v133 = vpop.permute.xlu0 %132
    %134 = vrot.lane.b32.xlu0 %v125, 111
    %v135 = vpop.permute.xlu0 %134
    %136 = vrot.lane.b32.xlu0 %v129, 111
    %v137 = vpop.permute.xlu0 %136
    %vm138 = vcmask 908288
    %v139 = vsel %vm138, %v131, %v133
    %v140 = vsel %vm138, %v133, %v135
    %v141 = vsel %vm138, %v135, %v137
    %v147 = vmul.f32 %v107, %v131
    %v148 = vmul.f32 %v108, %v139
    %v149 = vmul.f32 %v109, %v140
    %v150 = vmul.f32 %v110, %v141
    %v151 = vmul.f32 %v111, %v137
    %157 = vrot.lane.b32.xlu0 %v147, 17
    %v158 = vpop.permute.xlu0 %157
    %159 = vrot.lane.b32.xlu0 %v148, 17
    %v160 = vpop.permute.xlu0 %159
    %161 = vrot.lane.b32.xlu0 %v149, 17
    %v162 = vpop.permute.xlu0 %161
    %163 = vrot.lane.b32.xlu0 %v150, 17
    %v164 = vpop.permute.xlu0 %163
    %165 = vrot.lane.b32.xlu0 %v151, 17
    %v166 = vpop.permute.xlu0 %165
    %vm167 = vcmask 138240
    %v168 = vsel %vm167, %v158, %v160
    %v169 = vsel %vm167, %v160, %v162
    %v170 = vsel %vm167, %v162, %v164
    %v171 = vsel %vm167, %v164, %v166
    %176 = vst [vmem:[#allocation3] sm:$0xf] %v168
    %177 = vst [vmem:[#allocation3 + $0x8] sm:$0xf] %v169
    %178 = vst [vmem:[#allocation3 + $0x10] sm:$0xf] %v170
    %179 = vst [vmem:[#allocation3 + $0x18] sm:$0xf] %v171
    %v180 = vld [vmem:[#allocation2] sm:$0xf]
    %v181 = vld [vmem:[#allocation2 + $0x8] sm:$0xf]
    %v182 = vld [vmem:[#allocation2 + $0x10] sm:$0xf]
    %v183 = vld [vmem:[#allocation2 + $0x18] sm:$0xf]
    %v184 = vld [vmem:[#allocation2 + $0x20] sm:$0xf]
    %s185 = scalar_lea.vmem [#allocation4], 1
    %v186 = vld [vmem:[%s185] ss:$8 sm:$0xf]
    %v188 = vlaneseq
    %v189 = vshrl.u32 %v188, 7
    %v190 = vsub.s32 0, %v189
    %v191 = vrot.slane %v186, %v190
    %v192 = vlaneseq
    %v193 = vshrl.u32 %v192, 7
    %v194 = vsub.s32 1, %v193
    %v195 = vrot.slane %v186, %v194
    %v196 = vlaneseq
    %v197 = vshrl.u32 %v196, 7
    %v198 = vsub.s32 2, %v197
    %v199 = vrot.slane %v186, %v198
    %v200 = vlaneseq
    %v201 = vshrl.u32 %v200, 7
    %v202 = vsub.s32 3, %v201
    %v203 = vrot.slane %v186, %v202
    %204 = vrot.lane.b32.xlu0 %v191, 112
    %v205 = vpop.permute.xlu0 %204
    %206 = vrot.lane.b32.xlu0 %v195, 112
    %v207 = vpop.permute.xlu0 %206
    %208 = vrot.lane.b32.xlu0 %v199, 112
    %v209 = vpop.permute.xlu0 %208
    %210 = vrot.lane.b32.xlu0 %v203, 112
    %v211 = vpop.permute.xlu0 %210
    %vm212 = vcmask 916480
    %v213 = vsel %vm212, %v205, %v207
    %v214 = vsel %vm212, %v207, %v209
    %v215 = vsel %vm212, %v209, %v211
    %v221 = vmul.f32 %v180, %v205
    %v222 = vmul.f32 %v181, %v213
    %v223 = vmul.f32 %v182, %v214
    %v224 = vmul.f32 %v183, %v215
    %v225 = vmul.f32 %v184, %v211
    %231 = vrot.lane.b32.xlu0 %v221, 16
    %v232 = vpop.permute.xlu0 %231
    %233 = vrot.lane.b32.xlu0 %v222, 16
    %v234 = vpop.permute.xlu0 %233
    %235 = vrot.lane.b32.xlu0 %v223, 16
    %v236 = vpop.permute.xlu0 %235
    %237 = vrot.lane.b32.xlu0 %v224, 16
    %v238 = vpop.permute.xlu0 %237
    %239 = vrot.lane.b32.xlu0 %v225, 16
    %v240 = vpop.permute.xlu0 %239
    %vm241 = vcmask 130048
    %v242 = vsel %vm241, %v232, %v234
    %v243 = vsel %vm241, %v234, %v236
    %v244 = vsel %vm241, %v236, %v238
    %v245 = vsel %vm241, %v238, %v240
    %250 = vst [vmem:[#allocation3 + $0x20] sm:$0xf] %v242
    %251 = vst [vmem:[#allocation3 + $0x28] sm:$0xf] %v243
    %252 = vst [vmem:[#allocation3 + $0x30] sm:$0xf] %v244
    %253 = vst [vmem:[#allocation3 + $0x38] sm:$0xf] %v245
    %v254 = vld [vmem:[#allocation2] sm:$0xf]
    %v255 = vld [vmem:[#allocation2 + $0x8] sm:$0xf]
    %v256 = vld [vmem:[#allocation2 + $0x10] sm:$0xf]
    %v257 = vld [vmem:[#allocation2 + $0x18] sm:$0xf]
    %v258 = vld [vmem:[#allocation2 + $0x20] sm:$0xf]
    %s259 = scalar_lea.vmem [#allocation4], 2
    %v260 = vld [vmem:[%s259] ss:$8 sm:$0xf]
    %v262 = vlaneseq
    %v263 = vshrl.u32 %v262, 7
    %v264 = vsub.s32 0, %v263
    %v265 = vrot.slane %v260, %v264
    %v266 = vlaneseq
    %v267 = vshrl.u32 %v266, 7
    %v268 = vsub.s32 1, %v267
    %v269 = vrot.slane %v260, %v268
    %v270 = vlaneseq
    %v271 = vshrl.u32 %v270, 7
    %v272 = vsub.s32 2, %v271
    %v273 = vrot.slane %v260, %v272
    %v274 = vlaneseq
    %v275 = vshrl.u32 %v274, 7
    %v276 = vsub.s32 3, %v275
    %v277 = vrot.slane %v260, %v276
    %278 = vrot.lane.b32.xlu0 %v265, 113
    %v279 = vpop.permute.xlu0 %278
    %280 = vrot.lane.b32.xlu0 %v269, 113
    %v281 = vpop.permute.xlu0 %280
    %282 = vrot.lane.b32.xlu0 %v273, 113
    %v283 = vpop.permute.xlu0 %282
    %284 = vrot.lane.b32.xlu0 %v277, 113
    %v285 = vpop.permute.xlu0 %284
    %vm286 = vcmask 924672
    %v287 = vsel %vm286, %v279, %v281
    %v288 = vsel %vm286, %v281, %v283
    %v289 = vsel %vm286, %v283, %v285
    %v295 = vmul.f32 %v254, %v279
    %v296 = vmul.f32 %v255, %v287
    %v297 = vmul.f32 %v256, %v288
    %v298 = vmul.f32 %v257, %v289
    %v299 = vmul.f32 %v258, %v285
    %305 = vrot.lane.b32.xlu0 %v295, 15
    %v306 = vpop.permute.xlu0 %305
    %307 = vrot.lane.b32.xlu0 %v296, 15
    %v308 = vpop.permute.xlu0 %307
    %309 = vrot.lane.b32.xlu0 %v297, 15
    %v310 = vpop.permute.xlu0 %309
    %311 = vrot.lane.b32.xlu0 %v298, 15
    %v312 = vpop.permute.xlu0 %311
    %313 = vrot.lane.b32.xlu0 %v299, 15
    %v314 = vpop.permute.xlu0 %313
    %vm315 = vcmask 121856
    %v316 = vsel %vm315, %v306, %v308
    %v317 = vsel %vm315, %v308, %v310
    %v318 = vsel %vm315, %v310, %v312
    %v319 = vsel %vm315, %v312, %v314
    %324 = vst [vmem:[#allocation3 + $0x40] sm:$0xf] %v316
    %325 = vst [vmem:[#allocation3 + $0x48] sm:$0xf] %v317
    %326 = vst [vmem:[#allocation3 + $0x50] sm:$0xf] %v318
    %327 = vst [vmem:[#allocation3 + $0x58] sm:$0xf] %v319
    %v328 = vld [vmem:[#allocation2] sm:$0xf]
    %v329 = vld [vmem:[#allocation2 + $0x8] sm:$0xf]
    %v330 = vld [vmem:[#allocation2 + $0x10] sm:$0xf]
    %v331 = vld [vmem:[#allocation2 + $0x18] sm:$0xf]
    %v332 = vld [vmem:[#allocation2 + $0x20] sm:$0xf]
    %s333 = scalar_lea.vmem [#allocation4], 3
    %v334 = vld [vmem:[%s333] ss:$8 sm:$0xf]
    %v336 = vlaneseq
    %v337 = vshrl.u32 %v336, 7
    %v338 = vsub.s32 0, %v337
    %v339 = vrot.slane %v334, %v338
    %v340 = vlaneseq
    %v341 = vshrl.u32 %v340, 7
    %v342 = vsub.s32 1, %v341
    %v343 = vrot.slane %v334, %v342
    %v344 = vlaneseq
    %v345 = vshrl.u32 %v344, 7
    %v346 = vsub.s32 2, %v345
    %v347 = vrot.slane %v334, %v346
    %v348 = vlaneseq
    %v349 = vshrl.u32 %v348, 7
    %v350 = vsub.s32 3, %v349
    %v351 = vrot.slane %v334, %v350
    %352 = vrot.lane.b32.xlu0 %v339, 127
    %v353 = vpop.permute.xlu0 %352
    %354 = vrot.lane.b32.xlu0 %v343, 127
    %v355 = vpop.permute.xlu0 %354
    %356 = vrot.lane.b32.xlu0 %v347, 127
    %v357 = vpop.permute.xlu0 %356
    %358 = vrot.lane.b32.xlu0 %v351, 127
    %v359 = vpop.permute.xlu0 %358
    %vm360 = vcmask 1039360
    %v361 = vsel %vm360, %v353, %v355
    %v362 = vsel %vm360, %v355, %v357
    %v363 = vsel %vm360, %v357, %v359
    %v369 = vmul.f32 %v328, %v353
    %v370 = vmul.f32 %v329, %v361
    %v371 = vmul.f32 %v330, %v362
    %v372 = vmul.f32 %v331, %v363
    %v373 = vmul.f32 %v332, %v359
    %379 = vrot.lane.b32.xlu0 %v369, 1
    %v380 = vpop.permute.xlu0 %379
    %381 = vrot.lane.b32.xlu0 %v370, 1
    %v382 = vpop.permute.xlu0 %381
    %383 = vrot.lane.b32.xlu0 %v371, 1
    %v384 = vpop.permute.xlu0 %383
    %385 = vrot.lane.b32.xlu0 %v372, 1
    %v386 = vpop.permute.xlu0 %385
    %387 = vrot.lane.b32.xlu0 %v373, 1
    %v388 = vpop.permute.xlu0 %387
    %vm389 = vcmask 7168
    %v390 = vsel %vm389, %v380, %v382
    %v391 = vsel %vm389, %v382, %v384
    %v392 = vsel %vm389, %v384, %v386
    %v393 = vsel %vm389, %v386, %v388
    %398 = vst [vmem:[#allocation3 + $0x60] sm:$0xf] %v390
    %399 = vst [vmem:[#allocation3 + $0x68] sm:$0xf] %v391
    %400 = vst [vmem:[#allocation3 + $0x70] sm:$0xf] %v392
    %401 = vst [vmem:[#allocation3 + $0x78] sm:$0xf] %v393
    %v402 = vld [vmem:[#allocation2 + $0x8] sm:$0xf]
    %v403 = vld [vmem:[#allocation2 + $0x10] sm:$0xf]
    %v404 = vld [vmem:[#allocation2 + $0x18] sm:$0xf]
    %v405 = vld [vmem:[#allocation2 + $0x20] sm:$0xf]
    %406 = vst [vmem:[#allocation3 + $0x80] sm:$0xf] %v402
    %407 = vst [vmem:[#allocation3 + $0x88] sm:$0xf] %v403
    %408 = vst [vmem:[#allocation3 + $0x90] sm:$0xf] %v404
    %409 = vst [vmem:[#allocation3 + $0x98] sm:$0xf] %v405
    %v410 = vld [vmem:[#allocation2 + $0x8] sm:$0xf]
    %v411 = vld [vmem:[#allocation2 + $0x10] sm:$0xf]
    %v412 = vld [vmem:[#allocation2 + $0x18] sm:$0xf]
    %v413 = vld [vmem:[#allocation2 + $0x20] sm:$0xf]
    %v414 = vld [vmem:[#allocation2 + $0x28] sm:$0xf]
    %s415 = scalar_lea.vmem [#allocation4], 5
    %v416 = vld [vmem:[%s415] ss:$8 sm:$0xf]
    %v418 = vlaneseq
    %v419 = vshrl.u32 %v418, 7
    %v420 = vsub.s32 0, %v419
    %v421 = vrot.slane %v416, %v420
    %v422 = vlaneseq
    %v423 = vshrl.u32 %v422, 7
    %v424 = vsub.s32 1, %v423
    %v425 = vrot.slane %v416, %v424
    %v426 = vlaneseq
    %v427 = vshrl.u32 %v426, 7
    %v428 = vsub.s32 2, %v427
    %v429 = vrot.slane %v416, %v428
    %v430 = vlaneseq
    %v431 = vshrl.u32 %v430, 7
    %v432 = vsub.s32 3, %v431
    %v433 = vrot.slane %v416, %v432
    %434 = vrot.lane.b32.xlu0 %v421, 1
    %v435 = vpop.permute.xlu0 %434
    %436 = vrot.lane.b32.xlu0 %v425, 1
    %v437 = vpop.permute.xlu0 %436
    %438 = vrot.lane.b32.xlu0 %v429, 1
    %v439 = vpop.permute.xlu0 %438
    %440 = vrot.lane.b32.xlu0 %v433, 1
    %v441 = vpop.permute.xlu0 %440
    %v442 = vsel %vm389, %v435, %v437
    %v443 = vsel %vm389, %v437, %v439
    %v444 = vsel %vm389, %v439, %v441
    %v450 = vmul.f32 %v410, %v435
    %v451 = vmul.f32 %v411, %v442
    %v452 = vmul.f32 %v412, %v443
    %v453 = vmul.f32 %v413, %v444
    %v454 = vmul.f32 %v414, %v441
    %460 = vrot.lane.b32.xlu0 %v450, 127
    %v461 = vpop.permute.xlu0 %460
    %462 = vrot.lane.b32.xlu0 %v451, 127
    %v463 = vpop.permute.xlu0 %462
    %464 = vrot.lane.b32.xlu0 %v452, 127
    %v465 = vpop.permute.xlu0 %464
    %466 = vrot.lane.b32.xlu0 %v453, 127
    %v467 = vpop.permute.xlu0 %466
    %468 = vrot.lane.b32.xlu0 %v454, 127
    %v469 = vpop.permute.xlu0 %468
    %v470 = vsel %vm360, %v461, %v463
    %v471 = vsel %vm360, %v463, %v465
    %v472 = vsel %vm360, %v465, %v467
    %v473 = vsel %vm360, %v467, %v469
    %478 = vst [vmem:[#allocation3 + $0xa0] sm:$0xf] %v470
    %479 = vst [vmem:[#allocation3 + $0xa8] sm:$0xf] %v471
    %480 = vst [vmem:[#allocation3 + $0xb0] sm:$0xf] %v472
    %481 = vst [vmem:[#allocation3 + $0xb8] sm:$0xf] %v473
    %v482 = vld [vmem:[#allocation2 + $0x8] sm:$0xf]
    %v483 = vld [vmem:[#allocation2 + $0x10] sm:$0xf]
    %v484 = vld [vmem:[#allocation2 + $0x18] sm:$0xf]
    %v485 = vld [vmem:[#allocation2 + $0x20] sm:$0xf]
    %v486 = vld [vmem:[#allocation2 + $0x28] sm:$0xf]
    %s487 = scalar_lea.vmem [#allocation4], 6
    %v488 = vld [vmem:[%s487] ss:$8 sm:$0xf]
    %v490 = vlaneseq
    %v491 = vshrl.u32 %v490, 7
    %v492 = vsub.s32 0, %v491
    %v493 = vrot.slane %v488, %v492
    %v494 = vlaneseq
    %v495 = vshrl.u32 %v494, 7
    %v496 = vsub.s32 1, %v495
    %v497 = vrot.slane %v488, %v496
    %v498 = vlaneseq
    %v499 = vshrl.u32 %v498, 7
    %v500 = vsub.s32 2, %v499
    %v501 = vrot.slane %v488, %v500
    %v502 = vlaneseq
    %v503 = vshrl.u32 %v502, 7
    %v504 = vsub.s32 3, %v503
    %v505 = vrot.slane %v488, %v504
    %506 = vrot.lane.b32.xlu0 %v493, 15
    %v507 = vpop.permute.xlu0 %506
    %508 = vrot.lane.b32.xlu0 %v497, 15
    %v509 = vpop.permute.xlu0 %508
    %510 = vrot.lane.b32.xlu0 %v501, 15
    %v511 = vpop.permute.xlu0 %510
    %512 = vrot.lane.b32.xlu0 %v505, 15
    %v513 = vpop.permute.xlu0 %512
    %v514 = vsel %vm315, %v507, %v509
    %v515 = vsel %vm315, %v509, %v511
    %v516 = vsel %vm315, %v511, %v513
    %v522 = vmul.f32 %v482, %v507
    %v523 = vmul.f32 %v483, %v514
    %v524 = vmul.f32 %v484, %v515
    %v525 = vmul.f32 %v485, %v516
    %v526 = vmul.f32 %v486, %v513
    %532 = vrot.lane.b32.xlu0 %v522, 113
    %v533 = vpop.permute.xlu0 %532
    %534 = vrot.lane.b32.xlu0 %v523, 113
    %v535 = vpop.permute.xlu0 %534
    %536 = vrot.lane.b32.xlu0 %v524, 113
    %v537 = vpop.permute.xlu0 %536
    %538 = vrot.lane.b32.xlu0 %v525, 113
    %v539 = vpop.permute.xlu0 %538
    %540 = vrot.lane.b32.xlu0 %v526, 113
    %v541 = vpop.permute.xlu0 %540
    %v542 = vsel %vm286, %v533, %v535
    %v543 = vsel %vm286, %v535, %v537
    %v544 = vsel %vm286, %v537, %v539
    %v545 = vsel %vm286, %v539, %v541
    %550 = vst [vmem:[#allocation3 + $0xc0] sm:$0xf] %v542
    %551 = vst [vmem:[#allocation3 + $0xc8] sm:$0xf] %v543
    %552 = vst [vmem:[#allocation3 + $0xd0] sm:$0xf] %v544
    %553 = vst [vmem:[#allocation3 + $0xd8] sm:$0xf] %v545
    %v554 = vld [vmem:[#allocation2 + $0x8] sm:$0xf]
    %v555 = vld [vmem:[#allocation2 + $0x10] sm:$0xf]
    %v556 = vld [vmem:[#allocation2 + $0x18] sm:$0xf]
    %v557 = vld [vmem:[#allocation2 + $0x20] sm:$0xf]
    %v558 = vld [vmem:[#allocation2 + $0x28] sm:$0xf]
    %s559 = scalar_lea.vmem [#allocation4], 7
    %v560 = vld [vmem:[%s559] ss:$8 sm:$0xf]
    %v562 = vlaneseq
    %v563 = vshrl.u32 %v562, 7
    %v564 = vsub.s32 0, %v563
    %v565 = vrot.slane %v560, %v564
    %v566 = vlaneseq
    %v567 = vshrl.u32 %v566, 7
    %v568 = vsub.s32 1, %v567
    %v569 = vrot.slane %v560, %v568
    %v570 = vlaneseq
    %v571 = vshrl.u32 %v570, 7
    %v572 = vsub.s32 2, %v571
    %v573 = vrot.slane %v560, %v572
    %v574 = vlaneseq
    %v575 = vshrl.u32 %v574, 7
    %v576 = vsub.s32 3, %v575
    %v577 = vrot.slane %v560, %v576
    %578 = vrot.lane.b32.xlu0 %v565, 16
    %v579 = vpop.permute.xlu0 %578
    %580 = vrot.lane.b32.xlu0 %v569, 16
    %v581 = vpop.permute.xlu0 %580
    %582 = vrot.lane.b32.xlu0 %v573, 16
    %v583 = vpop.permute.xlu0 %582
    %584 = vrot.lane.b32.xlu0 %v577, 16
    %v585 = vpop.permute.xlu0 %584
    %v586 = vsel %vm241, %v579, %v581
    %v587 = vsel %vm241, %v581, %v583
    %v588 = vsel %vm241, %v583, %v585
    %v594 = vmul.f32 %v554, %v579
    %v595 = vmul.f32 %v555, %v586
    %v596 = vmul.f32 %v556, %v587
    %v597 = vmul.f32 %v557, %v588
    %v598 = vmul.f32 %v558, %v585
    %604 = vrot.lane.b32.xlu0 %v594, 112
    %v605 = vpop.permute.xlu0 %604
    %606 = vrot.lane.b32.xlu0 %v595, 112
    %v607 = vpop.permute.xlu0 %606
    %608 = vrot.lane.b32.xlu0 %v596, 112
    %v609 = vpop.permute.xlu0 %608
    %610 = vrot.lane.b32.xlu0 %v597, 112
    %v611 = vpop.permute.xlu0 %610
    %612 = vrot.lane.b32.xlu0 %v598, 112
    %v613 = vpop.permute.xlu0 %612
    %v614 = vsel %vm212, %v605, %v607
    %v615 = vsel %vm212, %v607, %v609
    %v616 = vsel %vm212, %v609, %v611
    %v617 = vsel %vm212, %v611, %v613
    %622 = vst [vmem:[#allocation3 + $0xe0] sm:$0xf] %v614
    %623 = vst [vmem:[#allocation3 + $0xe8] sm:$0xf] %v615
    %624 = vst [vmem:[#allocation3 + $0xf0] sm:$0xf] %v616
    %625 = vst [vmem:[#allocation3 + $0xf8] sm:$0xf] %v617
    %v626 = vld [vmem:[#allocation2 + $0x8] sm:$0xf]
    %v627 = vld [vmem:[#allocation2 + $0x10] sm:$0xf]
    %v628 = vld [vmem:[#allocation2 + $0x18] sm:$0xf]
    %v629 = vld [vmem:[#allocation2 + $0x20] sm:$0xf]
    %v630 = vld [vmem:[#allocation2 + $0x28] sm:$0xf]
    %s631 = scalar_lea.vmem [#allocation4], 32
    %v632 = vld [vmem:[%s631] ss:$8 sm:$0xf]
    %v634 = vlaneseq
    %v635 = vshrl.u32 %v634, 7
    %v636 = vsub.s32 0, %v635
    %v637 = vrot.slane %v632, %v636
    %v638 = vlaneseq
    %v639 = vshrl.u32 %v638, 7
    %v640 = vsub.s32 1, %v639
    %v641 = vrot.slane %v632, %v640
    %v642 = vlaneseq
    %v643 = vshrl.u32 %v642, 7
    %v644 = vsub.s32 2, %v643
    %v645 = vrot.slane %v632, %v644
    %v646 = vlaneseq
    %v647 = vshrl.u32 %v646, 7
    %v648 = vsub.s32 3, %v647
    %v649 = vrot.slane %v632, %v648
    %650 = vrot.lane.b32.xlu0 %v637, 17
    %v651 = vpop.permute.xlu0 %650
    %652 = vrot.lane.b32.xlu0 %v641, 17
    %v653 = vpop.permute.xlu0 %652
    %654 = vrot.lane.b32.xlu0 %v645, 17
    %v655 = vpop.permute.xlu0 %654
    %656 = vrot.lane.b32.xlu0 %v649, 17
    %v657 = vpop.permute.xlu0 %656
    %v658 = vsel %vm167, %v651, %v653
    %v659 = vsel %vm167, %v653, %v655
    %v660 = vsel %vm167, %v655, %v657
    %v666 = vmul.f32 %v626, %v651
    %v667 = vmul.f32 %v627, %v658
    %v668 = vmul.f32 %v628, %v659
    %v669 = vmul.f32 %v629, %v660
    %v670 = vmul.f32 %v630, %v657
    %676 = vrot.lane.b32.xlu0 %v666, 111
    %v677 = vpop.permute.xlu0 %676
    %678 = vrot.lane.b32.xlu0 %v667, 111
    %v679 = vpop.permute.xlu0 %678
    %680 = vrot.lane.b32.xlu0 %v668, 111
    %v681 = vpop.permute.xlu0 %680
    %682 = vrot.lane.b32.xlu0 %v669, 111
    %v683 = vpop.permute.xlu0 %682
    %684 = vrot.lane.b32.xlu0 %v670, 111
    %v685 = vpop.permute.xlu0 %684
    %v686 = vsel %vm138, %v677, %v679
    %v687 = vsel %vm138, %v679, %v681
    %v688 = vsel %vm138, %v681, %v683
    %v689 = vsel %vm138, %v683, %v685
    %694 = vst [vmem:[#allocation3 + $0x100] sm:$0xf] %v686
    %695 = vst [vmem:[#allocation3 + $0x108] sm:$0xf] %v687
    %696 = vst [vmem:[#allocation3 + $0x110] sm:$0xf] %v688
    %697 = vst [vmem:[#allocation3 + $0x118] sm:$0xf] %v689
    %v698 = vld [vmem:[%s2] sm:$0xff]
    %v699 = vld [vmem:[#allocation3] sm:$0xff]
    %v700 = vld [vmem:[#allocation3 + $0x8] sm:$0xff]
    %v701 = vld [vmem:[#allocation3 + $0x10] sm:$0xff]
    %v702 = vld [vmem:[#allocation3 + $0x18] sm:$0xff]
    %v703 = vld [vmem:[#allocation3 + $0x20] sm:$0xff]
    %v704 = vld [vmem:[#allocation3 + $0x28] sm:$0xff]
    %v705 = vld [vmem:[#allocation3 + $0x30] sm:$0xff]
    %v706 = vld [vmem:[#allocation3 + $0x38] sm:$0xff]
    %v707 = vld [vmem:[#allocation3 + $0x40] sm:$0xff]
    %v708 = vld [vmem:[#allocation3 + $0x48] sm:$0xff]
    %v709 = vld [vmem:[#allocation3 + $0x50] sm:$0xff]
    %v710 = vld [vmem:[#allocation3 + $0x58] sm:$0xff]
    %v711 = vld [vmem:[#allocation3 + $0x60] sm:$0xff]
    %v712 = vld [vmem:[#allocation3 + $0x68] sm:$0xff]
    %v713 = vld [vmem:[#allocation3 + $0x70] sm:$0xff]
    %v714 = vld [vmem:[#allocation3 + $0x78] sm:$0xff]
    %v715 = vld [vmem:[#allocation3 + $0x80] sm:$0xff]
    %v716 = vld [vmem:[#allocation3 + $0x88] sm:$0xff]
    %v717 = vld [vmem:[#allocation3 + $0x90] sm:$0xff]
    %v718 = vld [vmem:[#allocation3 + $0x98] sm:$0xff]
    %v719 = vld [vmem:[#allocation3 + $0xa0] sm:$0xff]
    %v720 = vld [vmem:[#allocation3 + $0xa8] sm:$0xff]
    %v721 = vld [vmem:[#allocation3 + $0xb0] sm:$0xff]
    %v722 = vld [vmem:[#allocation3 + $0xb8] sm:$0xff]
    %v723 = vld [vmem:[#allocation3 + $0xc0] sm:$0xff]
    %v724 = vld [vmem:[#allocation3 + $0xc8] sm:$0xff]
    %v725 = vld [vmem:[#allocation3 + $0xd0] sm:$0xff]
    %v726 = vld [vmem:[#allocation3 + $0xd8] sm:$0xff]
    %v727 = vld [vmem:[#allocation3 + $0xe0] sm:$0xff]
    %v728 = vld [vmem:[#allocation3 + $0xe8] sm:$0xff]
    %v729 = vld [vmem:[#allocation3 + $0xf0] sm:$0xff]
    %v730 = vld [vmem:[#allocation3 + $0xf8] sm:$0xff]
    %v731 = vld [vmem:[#allocation3 + $0x100] sm:$0xff]
    %v732 = vld [vmem:[#allocation3 + $0x108] sm:$0xff]
    %v733 = vld [vmem:[#allocation3 + $0x110] sm:$0xff]
    %v734 = vld [vmem:[#allocation3 + $0x118] sm:$0xff]
    %vm735 = vcmask 588800
    %v737 = vsel %vm735, %v698, 0
    %739 = vmatprep.subr.mxu0 %v700
    %740 = vmatpush1.msra.mxu0 %v699
    %741 = vmatprep.subr.mxu0 %v704
    %742 = vmatpush1.msra.mxu0 %v703
    %743 = vmatprep.subr.mxu0 %v708
    %744 = vmatpush1.msra.mxu0 %v707
    %745 = vmatprep.subr.mxu0 %v712
    %746 = vmatpush1.msra.mxu0 %v711
    %747 = vmatprep.subr.mxu0 %v716
    %748 = vmatpush1.msra.mxu0 %v715
    %749 = vmatprep.subr.mxu0 %v720
    %750 = vmatpush1.msra.mxu0 %v719
    %751 = vmatprep.subr.mxu0 %v724
    %752 = vmatpush1.msra.mxu0 %v723
    %753 = vmatprep.subr.mxu0 %v728
    %754 = vmatpush1.msra.mxu0 %v727
    %755 = vmatprep.subr.mxu0 %v732
    %756 = vmatpush1.msra.mxu0 %v731
    %757 = vmatprep.subr.mxu0 0.0
    %758 = vmatpush1.msra.mxu0 0.0
    %759 = vmatprep.subr.mxu0 0.0
    %760 = vmatpush1.msra.mxu0 0.0
    %761 = vmatprep.subr.mxu0 0.0
    %762 = vmatpush1.msra.mxu0 0.0
    %763 = vmatprep.subr.mxu0 0.0
    %764 = vmatpush1.msra.mxu0 0.0
    %765 = vmatprep.subr.mxu0 0.0
    %766 = vmatpush1.msra.mxu0 0.0
    %767 = vmatprep.subr.mxu0 0.0
    %768 = vmatpush1.msra.mxu0 0.0
    %769 = vmatprep.subr.mxu0 0.0
    %770 = vmatpush1.msra.mxu0 0.0
    %771 = vmatprep.subr.mxu0 0.0
    %772 = vmatpush1.msra.mxu0 0.0
    %773 = vmatprep.subr.mxu0 0.0
    %774 = vmatpush1.msra.mxu0 0.0
    %775 = vmatprep.subr.mxu0 0.0
    %776 = vmatpush1.msra.mxu0 0.0
    %777 = vmatprep.subr.mxu0 0.0
    %778 = vmatpush1.msra.mxu0 0.0
    %779 = vmatprep.subr.mxu0 0.0
    %780 = vmatpush1.msra.mxu0 0.0
    %781 = vmatprep.subr.mxu0 0.0
    %782 = vmatpush1.msra.mxu0 0.0
    %783 = vmatprep.subr.mxu0 0.0
    %784 = vmatpush1.msra.mxu0 0.0
    %785 = vmatprep.subr.mxu0 0.0
    %786 = vmatpush1.msra.mxu0 0.0
    %787 = vmatprep.subr.mxu0 0.0
    %788 = vmatpush1.msra.mxu0 0.0
    %789 = vmatprep.subr.mxu0 0.0
    %790 = vmatpush1.msra.mxu0 0.0
    %791 = vmatprep.subr.mxu0 0.0
    %792 = vmatpush1.msra.mxu0 0.0
    %793 = vmatprep.subr.mxu0 0.0
    %794 = vmatpush1.msra.mxu0 0.0
    %795 = vmatprep.subr.mxu0 0.0
    %796 = vmatpush1.msra.mxu0 0.0
    %797 = vmatprep.subr.mxu0 0.0
    %798 = vmatpush1.msra.mxu0 0.0
    %799 = vmatprep.subr.mxu0 0.0
    %800 = vmatpush1.msra.mxu0 0.0
    %801 = vmatprep.subr.mxu0 0.0
    %802 = vmatpush1.msra.mxu0 0.0
    %803 = vmatprep.mubr.f32.mxu0 0.0
    %804 = vmatmul.mubr.f32.gmra.mrb[0].mxu0 %v737
    %v805 = vpop.f32.mrb[0].mxu0
    %v806 = vadd.f32 0.0, %v805
    %v807 = vpop.f32.mrb[0].mxu0
    %v808 = vadd.f32 0.0, %v807
    %809 = vdwg.mxu0
    %810 = vmatprep.subr.mxu0 %v702
    %811 = vmatpush1.msra.mxu0 %v701
    %812 = vmatprep.subr.mxu0 %v706
    %813 = vmatpush1.msra.mxu0 %v705
    %814 = vmatprep.subr.mxu0 %v710
    %815 = vmatpush1.msra.mxu0 %v709
    %816 = vmatprep.subr.mxu0 %v714
    %817 = vmatpush1.msra.mxu0 %v713
    %818 = vmatprep.subr.mxu0 %v718
    %819 = vmatpush1.msra.mxu0 %v717
    %820 = vmatprep.subr.mxu0 %v722
    %821 = vmatpush1.msra.mxu0 %v721
    %822 = vmatprep.subr.mxu0 %v726
    %823 = vmatpush1.msra.mxu0 %v725
    %824 = vmatprep.subr.mxu0 %v730
    %825 = vmatpush1.msra.mxu0 %v729
    %826 = vmatprep.subr.mxu0 %v734
    %827 = vmatpush1.msra.mxu0 %v733
    %828 = vmatprep.subr.mxu0 0.0
    %829 = vmatpush1.msra.mxu0 0.0
    %830 = vmatprep.subr.mxu0 0.0
    %831 = vmatpush1.msra.mxu0 0.0
    %832 = vmatprep.subr.mxu0 0.0
    %833 = vmatpush1.msra.mxu0 0.0
    %834 = vmatprep.subr.mxu0 0.0
    %835 = vmatpush1.msra.mxu0 0.0
    %836 = vmatprep.subr.mxu0 0.0
    %837 = vmatpush1.msra.mxu0 0.0
    %838 = vmatprep.subr.mxu0 0.0
    %839 = vmatpush1.msra.mxu0 0.0
    %840 = vmatprep.subr.mxu0 0.0
    %841 = vmatpush1.msra.mxu0 0.0
    %842 = vmatprep.subr.mxu0 0.0
    %843 = vmatpush1.msra.mxu0 0.0
    %844 = vmatprep.subr.mxu0 0.0
    %845 = vmatpush1.msra.mxu0 0.0
    %846 = vmatprep.subr.mxu0 0.0
    %847 = vmatpush1.msra.mxu0 0.0
    %848 = vmatprep.subr.mxu0 0.0
    %849 = vmatpush1.msra.mxu0 0.0
    %850 = vmatprep.subr.mxu0 0.0
    %851 = vmatpush1.msra.mxu0 0.0
    %852 = vmatprep.subr.mxu0 0.0
    %853 = vmatpush1.msra.mxu0 0.0
    %854 = vmatprep.subr.mxu0 0.0
    %855 = vmatpush1.msra.mxu0 0.0
    %856 = vmatprep.subr.mxu0 0.0
    %857 = vmatpush1.msra.mxu0 0.0
    %858 = vmatprep.subr.mxu0 0.0
    %859 = vmatpush1.msra.mxu0 0.0
    %860 = vmatprep.subr.mxu0 0.0
    %861 = vmatpush1.msra.mxu0 0.0
    %862 = vmatprep.subr.mxu0 0.0
    %863 = vmatpush1.msra.mxu0 0.0
    %864 = vmatprep.subr.mxu0 0.0
    %865 = vmatpush1.msra.mxu0 0.0
    %866 = vmatprep.subr.mxu0 0.0
    %867 = vmatpush1.msra.mxu0 0.0
    %868 = vmatprep.subr.mxu0 0.0
    %869 = vmatpush1.msra.mxu0 0.0
    %870 = vmatprep.subr.mxu0 0.0
    %871 = vmatpush1.msra.mxu0 0.0
    %872 = vmatprep.subr.mxu0 0.0
    %873 = vmatpush1.msra.mxu0 0.0
    %874 = vmatprep.mubr.f32.mxu0 0.0
    %875 = vmatmul.mubr.f32.gmra.mrb[0].mxu0 %v737
    %v876 = vpop.f32.mrb[0].mxu0
    %v877 = vadd.f32 0.0, %v876
    %v878 = vpop.f32.mrb[0].mxu0
    %v879 = vadd.f32 0.0, %v878
    %880 = vdwg.mxu0
    %v881 = vadd.f32 %v806, %v808
    %v882 = vadd.f32 %v881, %v877
    %v883 = vadd.f32 %v882, %v879
    %884 = vadd.xlane.f32.xlu0 %v883
    %v885 = vpop.xlane.xlu0 %884
    %v886 = vmul.f32 %v885, 0.001953125
    %v887 = vmul.f32 %v806, %v806
    %v888 = vmul.f32 %v808, %v808
    %v889 = vmul.f32 %v877, %v877
    %v890 = vmul.f32 %v879, %v879
    %v891 = vadd.f32 %v887, %v888
    %v892 = vadd.f32 %v891, %v889
    %v893 = vadd.f32 %v892, %v890
    %894 = vadd.xlane.f32.xlu0 %v893
    %v895 = vpop.xlane.xlu0 %894
    %v896 = vmul.f32 %v895, 0.001953125
    %v897 = vmul.f32 %v886, %v886
    %v898 = vsub.f32 %v896, %v897
    %v899 = vld [vmem:[%s3] sm:$0xff]
    %v900 = vadd.f32 %v898, 1e-05
    %v901 = vrsqrt.pop %v900
    %v902 = vmul.f32 %v899, %v901
    %v903 = vld [vmem:[%s4] sm:$0xff]
    %v904 = vmul.f32 %v886, %v902
    %v905 = vsub.f32 %v903, %v904
    %907 = vset.pattern.permute.xlu0 0
    %908 = vperm.xlu0 %907, %v902
    %v909 = vpop.permute.xlu0 %908
    %v911 = vmul.f32 %v806, %v909
    %v912 = vmul.f32 %v808, %v909
    %v913 = vmul.f32 %v877, %v909
    %v914 = vmul.f32 %v879, %v909
    %916 = vset.pattern.permute.xlu0 0
    %917 = vperm.xlu0 %916, %v905
    %v918 = vpop.permute.xlu0 %917
    %v920 = vadd.f32 %v911, %v918
    %v921 = vadd.f32 %v912, %v918
    %v922 = vadd.f32 %v913, %v918
    %v923 = vadd.f32 %v914, %v918
    %vm924 = vcmp.gt.f32.partialorder %v920, 0.0
    %vm925 = vcmp.gt.f32.partialorder %v921, 0.0
    %vm926 = vcmp.gt.f32.partialorder %v922, 0.0
    %vm927 = vcmp.gt.f32.partialorder %v923, 0.0
    %v928 = vmul.f32 %v920, 0.2
    %v929 = vmul.f32 %v921, 0.2
    %v930 = vmul.f32 %v922, 0.2
    %v931 = vmul.f32 %v923, 0.2
    %v932 = vsel %vm924, %v920, %v928
    %v933 = vsel %vm925, %v921, %v929
    %v934 = vsel %vm926, %v922, %v930
    %v935 = vsel %vm927, %v923, %v931
    %936 = vst [vmem:[#allocation2 + $0x8] sm:$0xff] %v932
    %937 = vst [vmem:[#allocation2 + $0x10] sm:$0xff] %v933
    %938 = vst [vmem:[#allocation2 + $0x18] sm:$0xff] %v934
    %939 = vst [vmem:[#allocation2 + $0x20] sm:$0xff] %v935
    %v940 = vld [vmem:[#allocation2] sm:$0xff]
    %v941 = vld [vmem:[#allocation2 + $0x8] sm:$0xff]
    %v942 = vld [vmem:[#allocation2 + $0x10] sm:$0xff]
    %v943 = vld [vmem:[#allocation2 + $0x18] sm:$0xff]
    %v944 = vld [vmem:[#allocation2 + $0x20] sm:$0xff]
    %v945 = vld [vmem:[#allocation4] ss:$8 sm:$0xf]
    %v947 = vlaneseq
    %v948 = vshrl.u32 %v947, 7
    %v949 = vsub.s32 0, %v948
    %v950 = vrot.slane %v945, %v949
    %v951 = vlaneseq
    %v952 = vshrl.u32 %v951, 7
    %v953 = vsub.s32 1, %v952
    %v954 = vrot.slane %v945, %v953
    %v955 = vlaneseq
    %v956 = vshrl.u32 %v955, 7
    %v957 = vsub.s32 2, %v956
    %v958 = vrot.slane %v945, %v957
    %v959 = vlaneseq
    %v960 = vshrl.u32 %v959, 7
    %v961 = vsub.s32 3, %v960
    %v962 = vrot.slane %v945, %v961
    %963 = vrot.lane.b32.xlu0 %v950, 111
    %v964 = vpop.permute.xlu0 %963
    %965 = vrot.lane.b32.xlu0 %v954, 111
    %v966 = vpop.permute.xlu0 %965
    %967 = vrot.lane.b32.xlu0 %v958, 111
    %v968 = vpop.permute.xlu0 %967
    %969 = vrot.lane.b32.xlu0 %v962, 111
    %v970 = vpop.permute.xlu0 %969
    %v971 = vsel %vm138, %v964, %v966
    %v972 = vsel %vm138, %v966, %v968
    %v973 = vsel %vm138, %v968, %v970
    %v979 = vmul.f32 %v940, %v964
    %v980 = vmul.f32 %v941, %v971
    %v981 = vmul.f32 %v942, %v972
    %v982 = vmul.f32 %v943, %v973
    %v983 = vmul.f32 %v944, %v970
    %989 = vrot.lane.b32.xlu0 %v979, 17
    %v990 = vpop.permute.xlu0 %989
    %991 = vrot.lane.b32.xlu0 %v980, 17
    %v992 = vpop.permute.xlu0 %991
    %993 = vrot.lane.b32.xlu0 %v981, 17
    %v994 = vpop.permute.xlu0 %993
    %995 = vrot.lane.b32.xlu0 %v982, 17
    %v996 = vpop.permute.xlu0 %995
    %997 = vrot.lane.b32.xlu0 %v983, 17
    %v998 = vpop.permute.xlu0 %997
    %v999 = vsel %vm167, %v990, %v992
    %v1000 = vsel %vm167, %v992, %v994
    %v1001 = vsel %vm167, %v994, %v996
    %v1002 = vsel %vm167, %v996, %v998
    %1007 = vst [vmem:[#allocation3] sm:$0xff] %v999
    %1008 = vst [vmem:[#allocation3 + $0x8] sm:$0xff] %v1000
    %1009 = vst [vmem:[#allocation3 + $0x10] sm:$0xff] %v1001
    %1010 = vst [vmem:[#allocation3 + $0x18] sm:$0xff] %v1002
    %v1011 = vld [vmem:[#allocation2] sm:$0xff]
    %v1012 = vld [vmem:[#allocation2 + $0x8] sm:$0xff]
    %v1013 = vld [vmem:[#allocation2 + $0x10] sm:$0xff]
    %v1014 = vld [vmem:[#allocation2 + $0x18] sm:$0xff]
    %v1015 = vld [vmem:[#allocation2 + $0x20] sm:$0xff]
    %v1016 = vld [vmem:[%s185] ss:$8 sm:$0xf]
    %v1018 = vlaneseq
    %v1019 = vshrl.u32 %v1018, 7
    %v1020 = vsub.s32 0, %v1019
    %v1021 = vrot.slane %v1016, %v1020
    %v1022 = vlaneseq
    %v1023 = vshrl.u32 %v1022, 7
    %v1024 = vsub.s32 1, %v1023
    %v1025 = vrot.slane %v1016, %v1024
    %v1026 = vlaneseq
    %v1027 = vshrl.u32 %v1026, 7
    %v1028 = vsub.s32 2, %v1027
    %v1029 = vrot.slane %v1016, %v1028
    %v1030 = vlaneseq
    %v1031 = vshrl.u32 %v1030, 7
    %v1032 = vsub.s32 3, %v1031
    %v1033 = vrot.slane %v1016, %v1032
    %1034 = vrot.lane.b32.xlu0 %v1021, 112
    %v1035 = vpop.permute.xlu0 %1034
    %1036 = vrot.lane.b32.xlu0 %v1025, 112
    %v1037 = vpop.permute.xlu0 %1036
    %1038 = vrot.lane.b32.xlu0 %v1029, 112
    %v1039 = vpop.permute.xlu0 %1038
    %1040 = vrot.lane.b32.xlu0 %v1033, 112
    %v1041 = vpop.permute.xlu0 %1040
    %v1042 = vsel %vm212, %v1035, %v1037
    %v1043 = vsel %vm212, %v1037, %v1039
    %v1044 = vsel %vm212, %v1039, %v1041
    %v1050 = vmul.f32 %v1011, %v1035
    %v1051 = vmul.f32 %v1012, %v1042
    %v1052 = vmul.f32 %v1013, %v1043
    %v1053 = vmul.f32 %v1014, %v1044
    %v1054 = vmul.f32 %v1015, %v1041
    %1060 = vrot.lane.b32.xlu0 %v1050, 16
    %v1061 = vpop.permute.xlu0 %1060
    %1062 = vrot.lane.b32.xlu0 %v1051, 16
    %v1063 = vpop.permute.xlu0 %1062
    %1064 = vrot.lane.b32.xlu0 %v1052, 16
    %v1065 = vpop.permute.xlu0 %1064
    %1066 = vrot.lane.b32.xlu0 %v1053, 16
    %v1067 = vpop.permute.xlu0 %1066
    %1068 = vrot.lane.b32.xlu0 %v1054, 16
    %v1069 = vpop.permute.xlu0 %1068
    %v1070 = vsel %vm241, %v1061, %v1063
    %v1071 = vsel %vm241, %v1063, %v1065
    %v1072 = vsel %vm241, %v1065, %v1067
    %v1073 = vsel %vm241, %v1067, %v1069
    %1078 = vst [vmem:[#allocation3 + $0x20] sm:$0xff] %v1070
    %1079 = vst [vmem:[#allocation3 + $0x28] sm:$0xff] %v1071
    %1080 = vst [vmem:[#allocation3 + $0x30] sm:$0xff] %v1072
    %1081 = vst [vmem:[#allocation3 + $0x38] sm:$0xff] %v1073
    %v1082 = vld [vmem:[#allocation2] sm:$0xff]
    %v1083 = vld [vmem:[#allocation2 + $0x8] sm:$0xff]
    %v1084 = vld [vmem:[#allocation2 + $0x10] sm:$0xff]
    %v1085 = vld [vmem:[#allocation2 + $0x18] sm:$0xff]
    %v1086 = vld [vmem:[#allocation2 + $0x20] sm:$0xff]
    %v1087 = vld [vmem:[%s259] ss:$8 sm:$0xf]
    %v1089 = vlaneseq
    %v1090 = vshrl.u32 %v1089, 7
    %v1091 = vsub.s32 0, %v1090
    %v1092 = vrot.slane %v1087, %v1091
    %v1093 = vlaneseq
    %v1094 = vshrl.u32 %v1093, 7
    %v1095 = vsub.s32 1, %v1094
    %v1096 = vrot.slane %v1087, %v1095
    %v1097 = vlaneseq
    %v1098 = vshrl.u32 %v1097, 7
    %v1099 = vsub.s32 2, %v1098
    %v1100 = vrot.slane %v1087, %v1099
    %v1101 = vlaneseq
    %v1102 = vshrl.u32 %v1101, 7
    %v1103 = vsub.s32 3, %v1102
    %v1104 = vrot.slane %v1087, %v1103
    %1105 = vrot.lane.b32.xlu0 %v1092, 113
    %v1106 = vpop.permute.xlu0 %1105
    %1107 = vrot.lane.b32.xlu0 %v1096, 113
    %v1108 = vpop.permute.xlu0 %1107
    %1109 = vrot.lane.b32.xlu0 %v1100, 113
    %v1110 = vpop.permute.xlu0 %1109
    %1111 = vrot.lane.b32.xlu0 %v1104, 113
    %v1112 = vpop.permute.xlu0 %1111
    %v1113 = vsel %vm286, %v1106, %v1108
    %v1114 = vsel %vm286, %v1108, %v1110
    %v1115 = vsel %vm286, %v1110, %v1112
    %v1121 = vmul.f32 %v1082, %v1106
    %v1122 = vmul.f32 %v1083, %v1113
    %v1123 = vmul.f32 %v1084, %v1114
    %v1124 = vmul.f32 %v1085, %v1115
    %v1125 = vmul.f32 %v1086, %v1112
    %1131 = vrot.lane.b32.xlu0 %v1121, 15
    %v1132 = vpop.permute.xlu0 %1131
    %1133 = vrot.lane.b32.xlu0 %v1122, 15
    %v1134 = vpop.permute.xlu0 %1133
    %1135 = vrot.lane.b32.xlu0 %v1123, 15
    %v1136 = vpop.permute.xlu0 %1135
    %1137 = vrot.lane.b32.xlu0 %v1124, 15
    %v1138 = vpop.permute.xlu0 %1137
    %1139 = vrot.lane.b32.xlu0 %v1125, 15
    %v1140 = vpop.permute.xlu0 %1139
    %v1141 = vsel %vm315, %v1132, %v1134
    %v1142 = vsel %vm315, %v1134, %v1136
    %v1143 = vsel %vm315, %v1136, %v1138
    %v1144 = vsel %vm315, %v1138, %v1140
    %1149 = vst [vmem:[#allocation3 + $0x40] sm:$0xff] %v1141
    %1150 = vst [vmem:[#allocation3 + $0x48] sm:$0xff] %v1142
    %1151 = vst [vmem:[#allocation3 + $0x50] sm:$0xff] %v1143
    %1152 = vst [vmem:[#allocation3 + $0x58] sm:$0xff] %v1144
    %v1153 = vld [vmem:[#allocation2] sm:$0xff]
    %v1154 = vld [vmem:[#allocation2 + $0x8] sm:$0xff]
    %v1155 = vld [vmem:[#allocation2 + $0x10] sm:$0xff]
    %v1156 = vld [vmem:[#allocation2 + $0x18] sm:$0xff]
    %v1157 = vld [vmem:[#allocation2 + $0x20] sm:$0xff]
    %v1158 = vld [vmem:[%s333] ss:$8 sm:$0xf]
    %v1160 = vlaneseq
    %v1161 = vshrl.u32 %v1160, 7
    %v1162 = vsub.s32 0, %v1161
    %v1163 = vrot.slane %v1158, %v1162
    %v1164 = vlaneseq
    %v1165 = vshrl.u32 %v1164, 7
    %v1166 = vsub.s32 1, %v1165
    %v1167 = vrot.slane %v1158, %v1166
    %v1168 = vlaneseq
    %v1169 = vshrl.u32 %v1168, 7
    %v1170 = vsub.s32 2, %v1169
    %v1171 = vrot.slane %v1158, %v1170
    %v1172 = vlaneseq
    %v1173 = vshrl.u32 %v1172, 7
    %v1174 = vsub.s32 3, %v1173
    %v1175 = vrot.slane %v1158, %v1174
    %1176 = vrot.lane.b32.xlu0 %v1163, 127
    %v1177 = vpop.permute.xlu0 %1176
    %1178 = vrot.lane.b32.xlu0 %v1167, 127
    %v1179 = vpop.permute.xlu0 %1178
    %1180 = vrot.lane.b32.xlu0 %v1171, 127
    %v1181 = vpop.permute.xlu0 %1180
    %1182 = vrot.lane.b32.xlu0 %v1175, 127
    %v1183 = vpop.permute.xlu0 %1182
    %v1184 = vsel %vm360, %v1177, %v1179
    %v1185 = vsel %vm360, %v1179, %v1181
    %v1186 = vsel %vm360, %v1181, %v1183
    %v1192 = vmul.f32 %v1153, %v1177
    %v1193 = vmul.f32 %v1154, %v1184
    %v1194 = vmul.f32 %v1155, %v1185
    %v1195 = vmul.f32 %v1156, %v1186
    %v1196 = vmul.f32 %v1157, %v1183
    %1202 = vrot.lane.b32.xlu0 %v1192, 1
    %v1203 = vpop.permute.xlu0 %1202
    %1204 = vrot.lane.b32.xlu0 %v1193, 1
    %v1205 = vpop.permute.xlu0 %1204
    %1206 = vrot.lane.b32.xlu0 %v1194, 1
    %v1207 = vpop.permute.xlu0 %1206
    %1208 = vrot.lane.b32.xlu0 %v1195, 1
    %v1209 = vpop.permute.xlu0 %1208
    %1210 = vrot.lane.b32.xlu0 %v1196, 1
    %v1211 = vpop.permute.xlu0 %1210
    %v1212 = vsel %vm389, %v1203, %v1205
    %v1213 = vsel %vm389, %v1205, %v1207
    %v1214 = vsel %vm389, %v1207, %v1209
    %v1215 = vsel %vm389, %v1209, %v1211
    %1220 = vst [vmem:[#allocation3 + $0x60] sm:$0xff] %v1212
    %1221 = vst [vmem:[#allocation3 + $0x68] sm:$0xff] %v1213
    %1222 = vst [vmem:[#allocation3 + $0x70] sm:$0xff] %v1214
    %1223 = vst [vmem:[#allocation3 + $0x78] sm:$0xff] %v1215
    %v1224 = vld [vmem:[#allocation2 + $0x8] sm:$0xff]
    %v1225 = vld [vmem:[#allocation2 + $0x10] sm:$0xff]
    %v1226 = vld [vmem:[#allocation2 + $0x18] sm:$0xff]
    %v1227 = vld [vmem:[#allocation2 + $0x20] sm:$0xff]
    %1228 = vst [vmem:[#allocation3 + $0x80] sm:$0xff] %v1224
    %1229 = vst [vmem:[#allocation3 + $0x88] sm:$0xff] %v1225
    %1230 = vst [vmem:[#allocation3 + $0x90] sm:$0xff] %v1226
    %1231 = vst [vmem:[#allocation3 + $0x98] sm:$0xff] %v1227
    %v1232 = vld [vmem:[#allocation2 + $0x8] sm:$0xff]
    %v1233 = vld [vmem:[#allocation2 + $0x10] sm:$0xff]
    %v1234 = vld [vmem:[#allocation2 + $0x18] sm:$0xff]
    %v1235 = vld [vmem:[#allocation2 + $0x20] sm:$0xff]
    %v1236 = vld [vmem:[#allocation2 + $0x28] sm:$0xff]
    %v1237 = vld [vmem:[%s415] ss:$8 sm:$0xf]
    %v1239 = vlaneseq
    %v1240 = vshrl.u32 %v1239, 7
    %v1241 = vsub.s32 0, %v1240
    %v1242 = vrot.slane %v1237, %v1241
    %v1243 = vlaneseq
    %v1244 = vshrl.u32 %v1243, 7
    %v1245 = vsub.s32 1, %v1244
    %v1246 = vrot.slane %v1237, %v1245
    %v1247 = vlaneseq
    %v1248 = vshrl.u32 %v1247, 7
    %v1249 = vsub.s32 2, %v1248
    %v1250 = vrot.slane %v1237, %v1249
    %v1251 = vlaneseq
    %v1252 = vshrl.u32 %v1251, 7
    %v1253 = vsub.s32 3, %v1252
    %v1254 = vrot.slane %v1237, %v1253
    %1255 = vrot.lane.b32.xlu0 %v1242, 1
    %v1256 = vpop.permute.xlu0 %1255
    %1257 = vrot.lane.b32.xlu0 %v1246, 1
    %v1258 = vpop.permute.xlu0 %1257
    %1259 = vrot.lane.b32.xlu0 %v1250, 1
    %v1260 = vpop.permute.xlu0 %1259
    %1261 = vrot.lane.b32.xlu0 %v1254, 1
    %v1262 = vpop.permute.xlu0 %1261
    %v1263 = vsel %vm389, %v1256, %v1258
    %v1264 = vsel %vm389, %v1258, %v1260
    %v1265 = vsel %vm389, %v1260, %v1262
    %v1271 = vmul.f32 %v1232, %v1256
    %v1272 = vmul.f32 %v1233, %v1263
    %v1273 = vmul.f32 %v1234, %v1264
    %v1274 = vmul.f32 %v1235, %v1265
    %v1275 = vmul.f32 %v1236, %v1262
    %1281 = vrot.lane.b32.xlu0 %v1271, 127
    %v1282 = vpop.permute.xlu0 %1281
    %1283 = vrot.lane.b32.xlu0 %v1272, 127
    %v1284 = vpop.permute.xlu0 %1283
    %1285 = vrot.lane.b32.xlu0 %v1273, 127
    %v1286 = vpop.permute.xlu0 %1285
    %1287 = vrot.lane.b32.xlu0 %v1274, 127
    %v1288 = vpop.permute.xlu0 %1287
    %1289 = vrot.lane.b32.xlu0 %v1275, 127
    %v1290 = vpop.permute.xlu0 %1289
    %v1291 = vsel %vm360, %v1282, %v1284
    %v1292 = vsel %vm360, %v1284, %v1286
    %v1293 = vsel %vm360, %v1286, %v1288
    %v1294 = vsel %vm360, %v1288, %v1290
    %1299 = vst [vmem:[#allocation3 + $0xa0] sm:$0xff] %v1291
    %1300 = vst [vmem:[#allocation3 + $0xa8] sm:$0xff] %v1292
    %1301 = vst [vmem:[#allocation3 + $0xb0] sm:$0xff] %v1293
    %1302 = vst [vmem:[#allocation3 + $0xb8] sm:$0xff] %v1294
    %v1303 = vld [vmem:[#allocation2 + $0x8] sm:$0xff]
    %v1304 = vld [vmem:[#allocation2 + $0x10] sm:$0xff]
    %v1305 = vld [vmem:[#allocation2 + $0x18] sm:$0xff]
    %v1306 = vld [vmem:[#allocation2 + $0x20] sm:$0xff]
    %v1307 = vld [vmem:[#allocation2 + $0x28] sm:$0xff]
    %v1308 = vld [vmem:[%s487] ss:$8 sm:$0xf]
    %v1310 = vlaneseq
    %v1311 = vshrl.u32 %v1310, 7
    %v1312 = vsub.s32 0, %v1311
    %v1313 = vrot.slane %v1308, %v1312
    %v1314 = vlaneseq
    %v1315 = vshrl.u32 %v1314, 7
    %v1316 = vsub.s32 1, %v1315
    %v1317 = vrot.slane %v1308, %v1316
    %v1318 = vlaneseq
    %v1319 = vshrl.u32 %v1318, 7
    %v1320 = vsub.s32 2, %v1319
    %v1321 = vrot.slane %v1308, %v1320
    %v1322 = vlaneseq
    %v1323 = vshrl.u32 %v1322, 7
    %v1324 = vsub.s32 3, %v1323
    %v1325 = vrot.slane %v1308, %v1324
    %1326 = vrot.lane.b32.xlu0 %v1313, 15
    %v1327 = vpop.permute.xlu0 %1326
    %1328 = vrot.lane.b32.xlu0 %v1317, 15
    %v1329 = vpop.permute.xlu0 %1328
    %1330 = vrot.lane.b32.xlu0 %v1321, 15
    %v1331 = vpop.permute.xlu0 %1330
    %1332 = vrot.lane.b32.xlu0 %v1325, 15
    %v1333 = vpop.permute.xlu0 %1332
    %v1334 = vsel %vm315, %v1327, %v1329
    %v1335 = vsel %vm315, %v1329, %v1331
    %v1336 = vsel %vm315, %v1331, %v1333
    %v1342 = vmul.f32 %v1303, %v1327
    %v1343 = vmul.f32 %v1304, %v1334
    %v1344 = vmul.f32 %v1305, %v1335
    %v1345 = vmul.f32 %v1306, %v1336
    %v1346 = vmul.f32 %v1307, %v1333
    %1352 = vrot.lane.b32.xlu0 %v1342, 113
    %v1353 = vpop.permute.xlu0 %1352
    %1354 = vrot.lane.b32.xlu0 %v1343, 113
    %v1355 = vpop.permute.xlu0 %1354
    %1356 = vrot.lane.b32.xlu0 %v1344, 113
    %v1357 = vpop.permute.xlu0 %1356
    %1358 = vrot.lane.b32.xlu0 %v1345, 113
    %v1359 = vpop.permute.xlu0 %1358
    %1360 = vrot.lane.b32.xlu0 %v1346, 113
    %v1361 = vpop.permute.xlu0 %1360
    %v1362 = vsel %vm286, %v1353, %v1355
    %v1363 = vsel %vm286, %v1355, %v1357
    %v1364 = vsel %vm286, %v1357, %v1359
    %v1365 = vsel %vm286, %v1359, %v1361
    %1370 = vst [vmem:[#allocation3 + $0xc0] sm:$0xff] %v1362
    %1371 = vst [vmem:[#allocation3 + $0xc8] sm:$0xff] %v1363
    %1372 = vst [vmem:[#allocation3 + $0xd0] sm:$0xff] %v1364
    %1373 = vst [vmem:[#allocation3 + $0xd8] sm:$0xff] %v1365
    %v1374 = vld [vmem:[#allocation2 + $0x8] sm:$0xff]
    %v1375 = vld [vmem:[#allocation2 + $0x10] sm:$0xff]
    %v1376 = vld [vmem:[#allocation2 + $0x18] sm:$0xff]
    %v1377 = vld [vmem:[#allocation2 + $0x20] sm:$0xff]
    %v1378 = vld [vmem:[#allocation2 + $0x28] sm:$0xff]
    %v1379 = vld [vmem:[%s559] ss:$8 sm:$0xf]
    %v1381 = vlaneseq
    %v1382 = vshrl.u32 %v1381, 7
    %v1383 = vsub.s32 0, %v1382
    %v1384 = vrot.slane %v1379, %v1383
    %v1385 = vlaneseq
    %v1386 = vshrl.u32 %v1385, 7
    %v1387 = vsub.s32 1, %v1386
    %v1388 = vrot.slane %v1379, %v1387
    %v1389 = vlaneseq
    %v1390 = vshrl.u32 %v1389, 7
    %v1391 = vsub.s32 2, %v1390
    %v1392 = vrot.slane %v1379, %v1391
    %v1393 = vlaneseq
    %v1394 = vshrl.u32 %v1393, 7
    %v1395 = vsub.s32 3, %v1394
    %v1396 = vrot.slane %v1379, %v1395
    %1397 = vrot.lane.b32.xlu0 %v1384, 16
    %v1398 = vpop.permute.xlu0 %1397
    %1399 = vrot.lane.b32.xlu0 %v1388, 16
    %v1400 = vpop.permute.xlu0 %1399
    %1401 = vrot.lane.b32.xlu0 %v1392, 16
    %v1402 = vpop.permute.xlu0 %1401
    %1403 = vrot.lane.b32.xlu0 %v1396, 16
    %v1404 = vpop.permute.xlu0 %1403
    %v1405 = vsel %vm241, %v1398, %v1400
    %v1406 = vsel %vm241, %v1400, %v1402
    %v1407 = vsel %vm241, %v1402, %v1404
    %v1413 = vmul.f32 %v1374, %v1398
    %v1414 = vmul.f32 %v1375, %v1405
    %v1415 = vmul.f32 %v1376, %v1406
    %v1416 = vmul.f32 %v1377, %v1407
    %v1417 = vmul.f32 %v1378, %v1404
    %1423 = vrot.lane.b32.xlu0 %v1413, 112
    %v1424 = vpop.permute.xlu0 %1423
    %1425 = vrot.lane.b32.xlu0 %v1414, 112
    %v1426 = vpop.permute.xlu0 %1425
    %1427 = vrot.lane.b32.xlu0 %v1415, 112
    %v1428 = vpop.permute.xlu0 %1427
    %1429 = vrot.lane.b32.xlu0 %v1416, 112
    %v1430 = vpop.permute.xlu0 %1429
    %1431 = vrot.lane.b32.xlu0 %v1417, 112
    %v1432 = vpop.permute.xlu0 %1431
    %v1433 = vsel %vm212, %v1424, %v1426
    %v1434 = vsel %vm212, %v1426, %v1428
    %v1435 = vsel %vm212, %v1428, %v1430
    %v1436 = vsel %vm212, %v1430, %v1432
    %1441 = vst [vmem:[#allocation3 + $0xe0] sm:$0xff] %v1433
    %1442 = vst [vmem:[#allocation3 + $0xe8] sm:$0xff] %v1434
    %1443 = vst [vmem:[#allocation3 + $0xf0] sm:$0xff] %v1435
    %1444 = vst [vmem:[#allocation3 + $0xf8] sm:$0xff] %v1436
    %v1445 = vld [vmem:[#allocation2 + $0x8] sm:$0xff]
    %v1446 = vld [vmem:[#allocation2 + $0x10] sm:$0xff]
    %v1447 = vld [vmem:[#allocation2 + $0x18] sm:$0xff]
    %v1448 = vld [vmem:[#allocation2 + $0x20] sm:$0xff]
    %v1449 = vld [vmem:[#allocation2 + $0x28] sm:$0xff]
    %v1450 = vld [vmem:[%s631] ss:$8 sm:$0xf]
    %v1452 = vlaneseq
    %v1453 = vshrl.u32 %v1452, 7
    %v1454 = vsub.s32 0, %v1453
    %v1455 = vrot.slane %v1450, %v1454
    %v1456 = vlaneseq
    %v1457 = vshrl.u32 %v1456, 7
    %v1458 = vsub.s32 1, %v1457
    %v1459 = vrot.slane %v1450, %v1458
    %v1460 = vlaneseq
    %v1461 = vshrl.u32 %v1460, 7
    %v1462 = vsub.s32 2, %v1461
    %v1463 = vrot.slane %v1450, %v1462
    %v1464 = vlaneseq
    %v1465 = vshrl.u32 %v1464, 7
    %v1466 = vsub.s32 3, %v1465
    %v1467 = vrot.slane %v1450, %v1466
    %1468 = vrot.lane.b32.xlu0 %v1455, 17
    %v1469 = vpop.permute.xlu0 %1468
    %1470 = vrot.lane.b32.xlu0 %v1459, 17
    %v1471 = vpop.permute.xlu0 %1470
    %1472 = vrot.lane.b32.xlu0 %v1463, 17
    %v1473 = vpop.permute.xlu0 %1472
    %1474 = vrot.lane.b32.xlu0 %v1467, 17
    %v1475 = vpop.permute.xlu0 %1474
    %v1476 = vsel %vm167, %v1469, %v1471
    %v1477 = vsel %vm167, %v1471, %v1473
    %v1478 = vsel %vm167, %v1473, %v1475
    %v1484 = vmul.f32 %v1445, %v1469
    %v1485 = vmul.f32 %v1446, %v1476
    %v1486 = vmul.f32 %v1447, %v1477
    %v1487 = vmul.f32 %v1448, %v1478
    %v1488 = vmul.f32 %v1449, %v1475
    %1494 = vrot.lane.b32.xlu0 %v1484, 111
    %v1495 = vpop.permute.xlu0 %1494
    %1496 = vrot.lane.b32.xlu0 %v1485, 111
    %v1497 = vpop.permute.xlu0 %1496
    %1498 = vrot.lane.b32.xlu0 %v1486, 111
    %v1499 = vpop.permute.xlu0 %1498
    %1500 = vrot.lane.b32.xlu0 %v1487, 111
    %v1501 = vpop.permute.xlu0 %1500
    %1502 = vrot.lane.b32.xlu0 %v1488, 111
    %v1503 = vpop.permute.xlu0 %1502
    %v1504 = vsel %vm138, %v1495, %v1497
    %v1505 = vsel %vm138, %v1497, %v1499
    %v1506 = vsel %vm138, %v1499, %v1501
    %v1507 = vsel %vm138, %v1501, %v1503
    %1512 = vst [vmem:[#allocation3 + $0x100] sm:$0xff] %v1504
    %1513 = vst [vmem:[#allocation3 + $0x108] sm:$0xff] %v1505
    %1514 = vst [vmem:[#allocation3 + $0x110] sm:$0xff] %v1506
    %1515 = vst [vmem:[#allocation3 + $0x118] sm:$0xff] %v1507
    %v1516 = vld [vmem:[%s5] sm:$0xf]
    %v1517 = vld [vmem:[#allocation3] sm:$0xff]
    %v1518 = vld [vmem:[#allocation3 + $0x8] sm:$0xff]
    %v1519 = vld [vmem:[#allocation3 + $0x10] sm:$0xff]
    %v1520 = vld [vmem:[#allocation3 + $0x18] sm:$0xff]
    %v1521 = vld [vmem:[#allocation3 + $0x20] sm:$0xff]
    %v1522 = vld [vmem:[#allocation3 + $0x28] sm:$0xff]
    %v1523 = vld [vmem:[#allocation3 + $0x30] sm:$0xff]
    %v1524 = vld [vmem:[#allocation3 + $0x38] sm:$0xff]
    %v1525 = vld [vmem:[#allocation3 + $0x40] sm:$0xff]
    %v1526 = vld [vmem:[#allocation3 + $0x48] sm:$0xff]
    %v1527 = vld [vmem:[#allocation3 + $0x50] sm:$0xff]
    %v1528 = vld [vmem:[#allocation3 + $0x58] sm:$0xff]
    %v1529 = vld [vmem:[#allocation3 + $0x60] sm:$0xff]
    %v1530 = vld [vmem:[#allocation3 + $0x68] sm:$0xff]
    %v1531 = vld [vmem:[#allocation3 + $0x70] sm:$0xff]
    %v1532 = vld [vmem:[#allocation3 + $0x78] sm:$0xff]
    %v1533 = vld [vmem:[#allocation3 + $0x80] sm:$0xff]
    %v1534 = vld [vmem:[#allocation3 + $0x88] sm:$0xff]
    %v1535 = vld [vmem:[#allocation3 + $0x90] sm:$0xff]
    %v1536 = vld [vmem:[#allocation3 + $0x98] sm:$0xff]
    %v1537 = vld [vmem:[#allocation3 + $0xa0] sm:$0xff]
    %v1538 = vld [vmem:[#allocation3 + $0xa8] sm:$0xff]
    %v1539 = vld [vmem:[#allocation3 + $0xb0] sm:$0xff]
    %v1540 = vld [vmem:[#allocation3 + $0xb8] sm:$0xff]
    %v1541 = vld [vmem:[#allocation3 + $0xc0] sm:$0xff]
    %v1542 = vld [vmem:[#allocation3 + $0xc8] sm:$0xff]
    %v1543 = vld [vmem:[#allocation3 + $0xd0] sm:$0xff]
    %v1544 = vld [vmem:[#allocation3 + $0xd8] sm:$0xff]
    %v1545 = vld [vmem:[#allocation3 + $0xe0] sm:$0xff]
    %v1546 = vld [vmem:[#allocation3 + $0xe8] sm:$0xff]
    %v1547 = vld [vmem:[#allocation3 + $0xf0] sm:$0xff]
    %v1548 = vld [vmem:[#allocation3 + $0xf8] sm:$0xff]
    %v1549 = vld [vmem:[#allocation3 + $0x100] sm:$0xff]
    %v1550 = vld [vmem:[#allocation3 + $0x108] sm:$0xff]
    %v1551 = vld [vmem:[#allocation3 + $0x110] sm:$0xff]
    %v1552 = vld [vmem:[#allocation3 + $0x118] sm:$0xff]
    %v1554 = vsel %vm735, %v1516, 0
    %1556 = vmatprep.subr.mxu0 %v1518
    %1557 = vmatpush1.msra.mxu0 %v1517
    %1558 = vmatprep.subr.mxu0 %v1522
    %1559 = vmatpush1.msra.mxu0 %v1521
    %1560 = vmatprep.subr.mxu0 %v1526
    %1561 = vmatpush1.msra.mxu0 %v1525
    %1562 = vmatprep.subr.mxu0 %v1530
    %1563 = vmatpush1.msra.mxu0 %v1529
    %1564 = vmatprep.subr.mxu0 %v1534
    %1565 = vmatpush1.msra.mxu0 %v1533
    %1566 = vmatprep.subr.mxu0 %v1538
    %1567 = vmatpush1.msra.mxu0 %v1537
    %1568 = vmatprep.subr.mxu0 %v1542
    %1569 = vmatpush1.msra.mxu0 %v1541
    %1570 = vmatprep.subr.mxu0 %v1546
    %1571 = vmatpush1.msra.mxu0 %v1545
    %1572 = vmatprep.subr.mxu0 %v1550
    %1573 = vmatpush1.msra.mxu0 %v1549
    %1574 = vmatprep.subr.mxu0 0.0
    %1575 = vmatpush1.msra.mxu0 0.0
    %1576 = vmatprep.subr.mxu0 0.0
    %1577 = vmatpush1.msra.mxu0 0.0
    %1578 = vmatprep.subr.mxu0 0.0
    %1579 = vmatpush1.msra.mxu0 0.0
    %1580 = vmatprep.subr.mxu0 0.0
    %1581 = vmatpush1.msra.mxu0 0.0
    %1582 = vmatprep.subr.mxu0 0.0
    %1583 = vmatpush1.msra.mxu0 0.0
    %1584 = vmatprep.subr.mxu0 0.0
    %1585 = vmatpush1.msra.mxu0 0.0
    %1586 = vmatprep.subr.mxu0 0.0
    %1587 = vmatpush1.msra.mxu0 0.0
    %1588 = vmatprep.subr.mxu0 0.0
    %1589 = vmatpush1.msra.mxu0 0.0
    %1590 = vmatprep.subr.mxu0 0.0
    %1591 = vmatpush1.msra.mxu0 0.0
    %1592 = vmatprep.subr.mxu0 0.0
    %1593 = vmatpush1.msra.mxu0 0.0
    %1594 = vmatprep.subr.mxu0 0.0
    %1595 = vmatpush1.msra.mxu0 0.0
    %1596 = vmatprep.subr.mxu0 0.0
    %1597 = vmatpush1.msra.mxu0 0.0
    %1598 = vmatprep.subr.mxu0 0.0
    %1599 = vmatpush1.msra.mxu0 0.0
    %1600 = vmatprep.subr.mxu0 0.0
    %1601 = vmatpush1.msra.mxu0 0.0
    %1602 = vmatprep.subr.mxu0 0.0
    %1603 = vmatpush1.msra.mxu0 0.0
    %1604 = vmatprep.subr.mxu0 0.0
    %1605 = vmatpush1.msra.mxu0 0.0
    %1606 = vmatprep.subr.mxu0 0.0
    %1607 = vmatpush1.msra.mxu0 0.0
    %1608 = vmatprep.subr.mxu0 0.0
    %1609 = vmatpush1.msra.mxu0 0.0
    %1610 = vmatprep.subr.mxu0 0.0
    %1611 = vmatpush1.msra.mxu0 0.0
    %1612 = vmatprep.subr.mxu0 0.0
    %1613 = vmatpush1.msra.mxu0 0.0
    %1614 = vmatprep.subr.mxu0 0.0
    %1615 = vmatpush1.msra.mxu0 0.0
    %1616 = vmatprep.subr.mxu0 0.0
    %1617 = vmatpush1.msra.mxu0 0.0
    %1618 = vmatprep.subr.mxu0 0.0
    %1619 = vmatpush1.msra.mxu0 0.0
    %1620 = vmatprep.mubr.f32.mxu0 0.0
    %1621 = vmatmul.mubr.f32.gmra.mrb[0].mxu0 %v1554
    %v1622 = vpop.f32.mrb[0].mxu0
    %v1623 = vadd.f32 0.0, %v1622
    %v1624 = vpop.f32.mrb[0].mxu0
    %v1625 = vadd.f32 0.0, %v1624
    %1626 = vdwg.mxu0
    %1627 = vmatprep.subr.mxu0 %v1520
    %1628 = vmatpush1.msra.mxu0 %v1519
    %1629 = vmatprep.subr.mxu0 %v1524
    %1630 = vmatpush1.msra.mxu0 %v1523
    %1631 = vmatprep.subr.mxu0 %v1528
    %1632 = vmatpush1.msra.mxu0 %v1527
    %1633 = vmatprep.subr.mxu0 %v1532
    %1634 = vmatpush1.msra.mxu0 %v1531
    %1635 = vmatprep.subr.mxu0 %v1536
    %1636 = vmatpush1.msra.mxu0 %v1535
    %1637 = vmatprep.subr.mxu0 %v1540
    %1638 = vmatpush1.msra.mxu0 %v1539
    %1639 = vmatprep.subr.mxu0 %v1544
    %1640 = vmatpush1.msra.mxu0 %v1543
    %1641 = vmatprep.subr.mxu0 %v1548
    %1642 = vmatpush1.msra.mxu0 %v1547
    %1643 = vmatprep.subr.mxu0 %v1552
    %1644 = vmatpush1.msra.mxu0 %v1551
    %1645 = vmatprep.subr.mxu0 0.0
    %1646 = vmatpush1.msra.mxu0 0.0
    %1647 = vmatprep.subr.mxu0 0.0
    %1648 = vmatpush1.msra.mxu0 0.0
    %1649 = vmatprep.subr.mxu0 0.0
    %1650 = vmatpush1.msra.mxu0 0.0
    %1651 = vmatprep.subr.mxu0 0.0
    %1652 = vmatpush1.msra.mxu0 0.0
    %1653 = vmatprep.subr.mxu0 0.0
    %1654 = vmatpush1.msra.mxu0 0.0
    %1655 = vmatprep.subr.mxu0 0.0
    %1656 = vmatpush1.msra.mxu0 0.0
    %1657 = vmatprep.subr.mxu0 0.0
    %1658 = vmatpush1.msra.mxu0 0.0
    %1659 = vmatprep.subr.mxu0 0.0
    %1660 = vmatpush1.msra.mxu0 0.0
    %1661 = vmatprep.subr.mxu0 0.0
    %1662 = vmatpush1.msra.mxu0 0.0
    %1663 = vmatprep.subr.mxu0 0.0
    %1664 = vmatpush1.msra.mxu0 0.0
    %1665 = vmatprep.subr.mxu0 0.0
    %1666 = vmatpush1.msra.mxu0 0.0
    %1667 = vmatprep.subr.mxu0 0.0
    %1668 = vmatpush1.msra.mxu0 0.0
    %1669 = vmatprep.subr.mxu0 0.0
    %1670 = vmatpush1.msra.mxu0 0.0
    %1671 = vmatprep.subr.mxu0 0.0
    %1672 = vmatpush1.msra.mxu0 0.0
    %1673 = vmatprep.subr.mxu0 0.0
    %1674 = vmatpush1.msra.mxu0 0.0
    %1675 = vmatprep.subr.mxu0 0.0
    %1676 = vmatpush1.msra.mxu0 0.0
    %1677 = vmatprep.subr.mxu0 0.0
    %1678 = vmatpush1.msra.mxu0 0.0
    %1679 = vmatprep.subr.mxu0 0.0
    %1680 = vmatpush1.msra.mxu0 0.0
    %1681 = vmatprep.subr.mxu0 0.0
    %1682 = vmatpush1.msra.mxu0 0.0
    %1683 = vmatprep.subr.mxu0 0.0
    %1684 = vmatpush1.msra.mxu0 0.0
    %1685 = vmatprep.subr.mxu0 0.0
    %1686 = vmatpush1.msra.mxu0 0.0
    %1687 = vmatprep.subr.mxu0 0.0
    %1688 = vmatpush1.msra.mxu0 0.0
    %1689 = vmatprep.subr.mxu0 0.0
    %1690 = vmatpush1.msra.mxu0 0.0
    %1691 = vmatprep.mubr.f32.mxu0 0.0
    %1692 = vmatmul.mubr.f32.gmra.mrb[0].mxu0 %v1554
    %v1693 = vpop.f32.mrb[0].mxu0
    %v1694 = vadd.f32 0.0, %v1693
    %v1695 = vpop.f32.mrb[0].mxu0
    %v1696 = vadd.f32 0.0, %v1695
    %1697 = vdwg.mxu0
    %vm1698 = vcmask 1043456
    %v1699 = vsel %vm1698, %v1623, 0.0
    %v1700 = vsel %vm1698, %v1625, 0.0
    %v1701 = vadd.f32 %v1699, %v1700
    %v1702 = vsel %vm1698, %v1694, 0.0
    %v1703 = vadd.f32 %v1701, %v1702
    %v1704 = vsel %vm1698, %v1696, 0.0
    %v1705 = vadd.f32 %v1703, %v1704
    %1706 = vadd.xlane.f32.xlu0 %v1705
    %v1707 = vpop.xlane.xlu0 %1706
    %v1708 = vmul.f32 %v1707, 0.001953125
    %v1709 = vmul.f32 %v1623, %v1623
    %v1710 = vmul.f32 %v1625, %v1625
    %v1711 = vmul.f32 %v1694, %v1694
    %v1712 = vmul.f32 %v1696, %v1696
    %v1713 = vsel %vm1698, %v1709, 0.0
    %v1714 = vsel %vm1698, %v1710, 0.0
    %v1715 = vadd.f32 %v1713, %v1714
    %v1716 = vsel %vm1698, %v1711, 0.0
    %v1717 = vadd.f32 %v1715, %v1716
    %v1718 = vsel %vm1698, %v1712, 0.0
    %v1719 = vadd.f32 %v1717, %v1718
    %1720 = vadd.xlane.f32.xlu0 %v1719
    %v1721 = vpop.xlane.xlu0 %1720
    %v1722 = vmul.f32 %v1721, 0.001953125
    %v1723 = vmul.f32 %v1708, %v1708
    %v1724 = vsub.f32 %v1722, %v1723
    %v1725 = vld [vmem:[%s6] sm:$0xf]
    %v1726 = vadd.f32 %v1724, 1e-05
    %v1727 = vrsqrt.pop %v1726
    %v1728 = vmul.f32 %v1725, %v1727
    %v1729 = vld [vmem:[%s7] sm:$0xf]
    %v1730 = vmul.f32 %v1708, %v1728
    %v1731 = vsub.f32 %v1729, %v1730
    %1733 = vset.pattern.permute.xlu0 0
    %1734 = vperm.xlu0 %1733, %v1728
    %v1735 = vpop.permute.xlu0 %1734
    %v1737 = vmul.f32 %v1623, %v1735
    %v1738 = vmul.f32 %v1625, %v1735
    %v1739 = vmul.f32 %v1694, %v1735
    %v1740 = vmul.f32 %v1696, %v1735
    %1742 = vset.pattern.permute.xlu0 0
    %1743 = vperm.xlu0 %1742, %v1731
    %v1744 = vpop.permute.xlu0 %1743
    %v1746 = vadd.f32 %v1737, %v1744
    %v1747 = vadd.f32 %v1738, %v1744
    %v1748 = vadd.f32 %v1739, %v1744
    %v1749 = vadd.f32 %v1740, %v1744
    %vm1750 = vcmp.gt.f32.partialorder %v1746, 0.0
    %vm1751 = vcmp.gt.f32.partialorder %v1747, 0.0
    %vm1752 = vcmp.gt.f32.partialorder %v1748, 0.0
    %vm1753 = vcmp.gt.f32.partialorder %v1749, 0.0
    %v1754 = vmul.f32 %v1746, 0.2
    %v1755 = vmul.f32 %v1747, 0.2
    %v1756 = vmul.f32 %v1748, 0.2
    %v1757 = vmul.f32 %v1749, 0.2
    %v1758 = vsel %vm1750, %v1746, %v1754
    %v1759 = vsel %vm1751, %v1747, %v1755
    %v1760 = vsel %vm1752, %v1748, %v1756
    %v1761 = vsel %vm1753, %v1749, %v1757
    %1762 = vst [vmem:[#allocation2 + $0x8] sm:$0xf] %v1758
    %1763 = vst [vmem:[#allocation2 + $0x10] sm:$0xf] %v1759
    %1764 = vst [vmem:[#allocation2 + $0x18] sm:$0xf] %v1760
    %1765 = vst [vmem:[#allocation2 + $0x20] sm:$0xf] %v1761
    %v1766 = vld [vmem:[#allocation2] sm:$0xf]
    %v1767 = vld [vmem:[#allocation2 + $0x8] sm:$0xf]
    %v1768 = vld [vmem:[#allocation2 + $0x10] sm:$0xf]
    %v1769 = vld [vmem:[#allocation2 + $0x18] sm:$0xf]
    %v1770 = vld [vmem:[#allocation2 + $0x20] sm:$0xf]
    %v1771 = vld [vmem:[#allocation4] ss:$8 sm:$0xf]
    %v1773 = vlaneseq
    %v1774 = vshrl.u32 %v1773, 7
    %v1775 = vsub.s32 0, %v1774
    %v1776 = vrot.slane %v1771, %v1775
    %v1777 = vlaneseq
    %v1778 = vshrl.u32 %v1777, 7
    %v1779 = vsub.s32 1, %v1778
    %v1780 = vrot.slane %v1771, %v1779
    %v1781 = vlaneseq
    %v1782 = vshrl.u32 %v1781, 7
    %v1783 = vsub.s32 2, %v1782
    %v1784 = vrot.slane %v1771, %v1783
    %v1785 = vlaneseq
    %v1786 = vshrl.u32 %v1785, 7
    %v1787 = vsub.s32 3, %v1786
    %v1788 = vrot.slane %v1771, %v1787
    %1789 = vrot.lane.b32.xlu0 %v1776, 111
    %v1790 = vpop.permute.xlu0 %1789
    %1791 = vrot.lane.b32.xlu0 %v1780, 111
    %v1792 = vpop.permute.xlu0 %1791
    %1793 = vrot.lane.b32.xlu0 %v1784, 111
    %v1794 = vpop.permute.xlu0 %1793
    %1795 = vrot.lane.b32.xlu0 %v1788, 111
    %v1796 = vpop.permute.xlu0 %1795
    %v1797 = vsel %vm138, %v1790, %v1792
    %v1798 = vsel %vm138, %v1792, %v1794
    %v1799 = vsel %vm138, %v1794, %v1796
    %v1805 = vmul.f32 %v1766, %v1790
    %v1806 = vmul.f32 %v1767, %v1797
    %v1807 = vmul.f32 %v1768, %v1798
    %v1808 = vmul.f32 %v1769, %v1799
    %v1809 = vmul.f32 %v1770, %v1796
    %1815 = vrot.lane.b32.xlu0 %v1805, 17
    %v1816 = vpop.permute.xlu0 %1815
    %1817 = vrot.lane.b32.xlu0 %v1806, 17
    %v1818 = vpop.permute.xlu0 %1817
    %1819 = vrot.lane.b32.xlu0 %v1807, 17
    %v1820 = vpop.permute.xlu0 %1819
    %1821 = vrot.lane.b32.xlu0 %v1808, 17
    %v1822 = vpop.permute.xlu0 %1821
    %1823 = vrot.lane.b32.xlu0 %v1809, 17
    %v1824 = vpop.permute.xlu0 %1823
    %v1825 = vsel %vm167, %v1816, %v1818
    %v1826 = vsel %vm167, %v1818, %v1820
    %v1827 = vsel %vm167, %v1820, %v1822
    %v1828 = vsel %vm167, %v1822, %v1824
    %1833 = vst [vmem:[#allocation3] sm:$0xf] %v1825
    %1834 = vst [vmem:[#allocation3 + $0x8] sm:$0xf] %v1826
    %1835 = vst [vmem:[#allocation3 + $0x10] sm:$0xf] %v1827
    %1836 = vst [vmem:[#allocation3 + $0x18] sm:$0xf] %v1828
    %v1837 = vld [vmem:[#allocation2] sm:$0xf]
    %v1838 = vld [vmem:[#allocation2 + $0x8] sm:$0xf]
    %v1839 = vld [vmem:[#allocation2 + $0x10] sm:$0xf]
    %v1840 = vld [vmem:[#allocation2 + $0x18] sm:$0xf]
    %v1841 = vld [vmem:[#allocation2 + $0x20] sm:$0xf]
    %v1842 = vld [vmem:[%s185] ss:$8 sm:$0xf]
    %v1844 = vlaneseq
    %v1845 = vshrl.u32 %v1844, 7
    %v1846 = vsub.s32 0, %v1845
    %v1847 = vrot.slane %v1842, %v1846
    %v1848 = vlaneseq
    %v1849 = vshrl.u32 %v1848, 7
    %v1850 = vsub.s32 1, %v1849
    %v1851 = vrot.slane %v1842, %v1850
    %v1852 = vlaneseq
    %v1853 = vshrl.u32 %v1852, 7
    %v1854 = vsub.s32 2, %v1853
    %v1855 = vrot.slane %v1842, %v1854
    %v1856 = vlaneseq
    %v1857 = vshrl.u32 %v1856, 7
    %v1858 = vsub.s32 3, %v1857
    %v1859 = vrot.slane %v1842, %v1858
    %1860 = vrot.lane.b32.xlu0 %v1847, 112
    %v1861 = vpop.permute.xlu0 %1860
    %1862 = vrot.lane.b32.xlu0 %v1851, 112
    %v1863 = vpop.permute.xlu0 %1862
    %1864 = vrot.lane.b32.xlu0 %v1855, 112
    %v1865 = vpop.permute.xlu0 %1864
    %1866 = vrot.lane.b32.xlu0 %v1859, 112
    %v1867 = vpop.permute.xlu0 %1866
    %v1868 = vsel %vm212, %v1861, %v1863
    %v1869 = vsel %vm212, %v1863, %v1865
    %v1870 = vsel %vm212, %v1865, %v1867
    %v1876 = vmul.f32 %v1837, %v1861
    %v1877 = vmul.f32 %v1838, %v1868
    %v1878 = vmul.f32 %v1839, %v1869
    %v1879 = vmul.f32 %v1840, %v1870
    %v1880 = vmul.f32 %v1841, %v1867
    %1886 = vrot.lane.b32.xlu0 %v1876, 16
    %v1887 = vpop.permute.xlu0 %1886
    %1888 = vrot.lane.b32.xlu0 %v1877, 16
    %v1889 = vpop.permute.xlu0 %1888
    %1890 = vrot.lane.b32.xlu0 %v1878, 16
    %v1891 = vpop.permute.xlu0 %1890
    %1892 = vrot.lane.b32.xlu0 %v1879, 16
    %v1893 = vpop.permute.xlu0 %1892
    %1894 = vrot.lane.b32.xlu0 %v1880, 16
    %v1895 = vpop.permute.xlu0 %1894
    %v1896 = vsel %vm241, %v1887, %v1889
    %v1897 = vsel %vm241, %v1889, %v1891
    %v1898 = vsel %vm241, %v1891, %v1893
    %v1899 = vsel %vm241, %v1893, %v1895
    %1904 = vst [vmem:[#allocation3 + $0x20] sm:$0xf] %v1896
    %1905 = vst [vmem:[#allocation3 + $0x28] sm:$0xf] %v1897
    %1906 = vst [vmem:[#allocation3 + $0x30] sm:$0xf] %v1898
    %1907 = vst [vmem:[#allocation3 + $0x38] sm:$0xf] %v1899
    %v1908 = vld [vmem:[#allocation2] sm:$0xf]
    %v1909 = vld [vmem:[#allocation2 + $0x8] sm:$0xf]
    %v1910 = vld [vmem:[#allocation2 + $0x10] sm:$0xf]
    %v1911 = vld [vmem:[#allocation2 + $0x18] sm:$0xf]
    %v1912 = vld [vmem:[#allocation2 + $0x20] sm:$0xf]
    %v1913 = vld [vmem:[%s259] ss:$8 sm:$0xf]
    %v1915 = vlaneseq
    %v1916 = vshrl.u32 %v1915, 7
    %v1917 = vsub.s32 0, %v1916
    %v1918 = vrot.slane %v1913, %v1917
    %v1919 = vlaneseq
    %v1920 = vshrl.u32 %v1919, 7
    %v1921 = vsub.s32 1, %v1920
    %v1922 = vrot.slane %v1913, %v1921
    %v1923 = vlaneseq
    %v1924 = vshrl.u32 %v1923, 7
    %v1925 = vsub.s32 2, %v1924
    %v1926 = vrot.slane %v1913, %v1925
    %v1927 = vlaneseq
    %v1928 = vshrl.u32 %v1927, 7
    %v1929 = vsub.s32 3, %v1928
    %v1930 = vrot.slane %v1913, %v1929
    %1931 = vrot.lane.b32.xlu0 %v1918, 113
    %v1932 = vpop.permute.xlu0 %1931
    %1933 = vrot.lane.b32.xlu0 %v1922, 113
    %v1934 = vpop.permute.xlu0 %1933
    %1935 = vrot.lane.b32.xlu0 %v1926, 113
    %v1936 = vpop.permute.xlu0 %1935
    %1937 = vrot.lane.b32.xlu0 %v1930, 113
    %v1938 = vpop.permute.xlu0 %1937
    %v1939 = vsel %vm286, %v1932, %v1934
    %v1940 = vsel %vm286, %v1934, %v1936
    %v1941 = vsel %vm286, %v1936, %v1938
    %v1947 = vmul.f32 %v1908, %v1932
    %v1948 = vmul.f32 %v1909, %v1939
    %v1949 = vmul.f32 %v1910, %v1940
    %v1950 = vmul.f32 %v1911, %v1941
    %v1951 = vmul.f32 %v1912, %v1938
    %1957 = vrot.lane.b32.xlu0 %v1947, 15
    %v1958 = vpop.permute.xlu0 %1957
    %1959 = vrot.lane.b32.xlu0 %v1948, 15
    %v1960 = vpop.permute.xlu0 %1959
    %1961 = vrot.lane.b32.xlu0 %v1949, 15
    %v1962 = vpop.permute.xlu0 %1961
    %1963 = vrot.lane.b32.xlu0 %v1950, 15
    %v1964 = vpop.permute.xlu0 %1963
    %1965 = vrot.lane.b32.xlu0 %v1951, 15
    %v1966 = vpop.permute.xlu0 %1965
    %v1967 = vsel %vm315, %v1958, %v1960
    %v1968 = vsel %vm315, %v1960, %v1962
    %v1969 = vsel %vm315, %v1962, %v1964
    %v1970 = vsel %vm315, %v1964, %v1966
    %1975 = vst [vmem:[#allocation3 + $0x40] sm:$0xf] %v1967
    %1976 = vst [vmem:[#allocation3 + $0x48] sm:$0xf] %v1968
    %1977 = vst [vmem:[#allocation3 + $0x50] sm:$0xf] %v1969
    %1978 = vst [vmem:[#allocation3 + $0x58] sm:$0xf] %v1970
    %v1979 = vld [vmem:[#allocation2] sm:$0xf]
    %v1980 = vld [vmem:[#allocation2 + $0x8] sm:$0xf]
    %v1981 = vld [vmem:[#allocation2 + $0x10] sm:$0xf]
    %v1982 = vld [vmem:[#allocation2 + $0x18] sm:$0xf]
    %v1983 = vld [vmem:[#allocation2 + $0x20] sm:$0xf]
    %v1984 = vld [vmem:[%s333] ss:$8 sm:$0xf]
    %v1986 = vlaneseq
    %v1987 = vshrl.u32 %v1986, 7
    %v1988 = vsub.s32 0, %v1987
    %v1989 = vrot.slane %v1984, %v1988
    %v1990 = vlaneseq
    %v1991 = vshrl.u32 %v1990, 7
    %v1992 = vsub.s32 1, %v1991
    %v1993 = vrot.slane %v1984, %v1992
    %v1994 = vlaneseq
    %v1995 = vshrl.u32 %v1994, 7
    %v1996 = vsub.s32 2, %v1995
    %v1997 = vrot.slane %v1984, %v1996
    %v1998 = vlaneseq
    %v1999 = vshrl.u32 %v1998, 7
    %v2000 = vsub.s32 3, %v1999
    %v2001 = vrot.slane %v1984, %v2000
    %2002 = vrot.lane.b32.xlu0 %v1989, 127
    %v2003 = vpop.permute.xlu0 %2002
    %2004 = vrot.lane.b32.xlu0 %v1993, 127
    %v2005 = vpop.permute.xlu0 %2004
    %2006 = vrot.lane.b32.xlu0 %v1997, 127
    %v2007 = vpop.permute.xlu0 %2006
    %2008 = vrot.lane.b32.xlu0 %v2001, 127
    %v2009 = vpop.permute.xlu0 %2008
    %v2010 = vsel %vm360, %v2003, %v2005
    %v2011 = vsel %vm360, %v2005, %v2007
    %v2012 = vsel %vm360, %v2007, %v2009
    %v2018 = vmul.f32 %v1979, %v2003
    %v2019 = vmul.f32 %v1980, %v2010
    %v2020 = vmul.f32 %v1981, %v2011
    %v2021 = vmul.f32 %v1982, %v2012
    %v2022 = vmul.f32 %v1983, %v2009
    %2028 = vrot.lane.b32.xlu0 %v2018, 1
    %v2029 = vpop.permute.xlu0 %2028
    %2030 = vrot.lane.b32.xlu0 %v2019, 1
    %v2031 = vpop.permute.xlu0 %2030
    %2032 = vrot.lane.b32.xlu0 %v2020, 1
    %v2033 = vpop.permute.xlu0 %2032
    %2034 = vrot.lane.b32.xlu0 %v2021, 1
    %v2035 = vpop.permute.xlu0 %2034
    %2036 = vrot.lane.b32.xlu0 %v2022, 1
    %v2037 = vpop.permute.xlu0 %2036
    %v2038 = vsel %vm389, %v2029, %v2031
    %v2039 = vsel %vm389, %v2031, %v2033
    %v2040 = vsel %vm389, %v2033, %v2035
    %v2041 = vsel %vm389, %v2035, %v2037
    %2046 = vst [vmem:[#allocation3 + $0x60] sm:$0xf] %v2038
    %2047 = vst [vmem:[#allocation3 + $0x68] sm:$0xf] %v2039
    %2048 = vst [vmem:[#allocation3 + $0x70] sm:$0xf] %v2040
    %2049 = vst [vmem:[#allocation3 + $0x78] sm:$0xf] %v2041
    %v2050 = vld [vmem:[#allocation2 + $0x8] sm:$0xf]
    %v2051 = vld [vmem:[#allocation2 + $0x10] sm:$0xf]
    %v2052 = vld [vmem:[#allocation2 + $0x18] sm:$0xf]
    %v2053 = vld [vmem:[#allocation2 + $0x20] sm:$0xf]
    %2054 = vst [vmem:[#allocation3 + $0x80] sm:$0xf] %v2050
    %2055 = vst [vmem:[#allocation3 + $0x88] sm:$0xf] %v2051
    %2056 = vst [vmem:[#allocation3 + $0x90] sm:$0xf] %v2052
    %2057 = vst [vmem:[#allocation3 + $0x98] sm:$0xf] %v2053
    %v2058 = vld [vmem:[#allocation2 + $0x8] sm:$0xf]
    %v2059 = vld [vmem:[#allocation2 + $0x10] sm:$0xf]
    %v2060 = vld [vmem:[#allocation2 + $0x18] sm:$0xf]
    %v2061 = vld [vmem:[#allocation2 + $0x20] sm:$0xf]
    %v2062 = vld [vmem:[#allocation2 + $0x28] sm:$0xf]
    %v2063 = vld [vmem:[%s415] ss:$8 sm:$0xf]
    %v2065 = vlaneseq
    %v2066 = vshrl.u32 %v2065, 7
    %v2067 = vsub.s32 0, %v2066
    %v2068 = vrot.slane %v2063, %v2067
    %v2069 = vlaneseq
    %v2070 = vshrl.u32 %v2069, 7
    %v2071 = vsub.s32 1, %v2070
    %v2072 = vrot.slane %v2063, %v2071
    %v2073 = vlaneseq
    %v2074 = vshrl.u32 %v2073, 7
    %v2075 = vsub.s32 2, %v2074
    %v2076 = vrot.slane %v2063, %v2075
    %v2077 = vlaneseq
    %v2078 = vshrl.u32 %v2077, 7
    %v2079 = vsub.s32 3, %v2078
    %v2080 = vrot.slane %v2063, %v2079
    %2081 = vrot.lane.b32.xlu0 %v2068, 1
    %v2082 = vpop.permute.xlu0 %2081
    %2083 = vrot.lane.b32.xlu0 %v2072, 1
    %v2084 = vpop.permute.xlu0 %2083
    %2085 = vrot.lane.b32.xlu0 %v2076, 1
    %v2086 = vpop.permute.xlu0 %2085
    %2087 = vrot.lane.b32.xlu0 %v2080, 1
    %v2088 = vpop.permute.xlu0 %2087
    %v2089 = vsel %vm389, %v2082, %v2084
    %v2090 = vsel %vm389, %v2084, %v2086
    %v2091 = vsel %vm389, %v2086, %v2088
    %v2097 = vmul.f32 %v2058, %v2082
    %v2098 = vmul.f32 %v2059, %v2089
    %v2099 = vmul.f32 %v2060, %v2090
    %v2100 = vmul.f32 %v2061, %v2091
    %v2101 = vmul.f32 %v2062, %v2088
    %2107 = vrot.lane.b32.xlu0 %v2097, 127
    %v2108 = vpop.permute.xlu0 %2107
    %2109 = vrot.lane.b32.xlu0 %v2098, 127
    %v2110 = vpop.permute.xlu0 %2109
    %2111 = vrot.lane.b32.xlu0 %v2099, 127
    %v2112 = vpop.permute.xlu0 %2111
    %2113 = vrot.lane.b32.xlu0 %v2100, 127
    %v2114 = vpop.permute.xlu0 %2113
    %2115 = vrot.lane.b32.xlu0 %v2101, 127
    %v2116 = vpop.permute.xlu0 %2115
    %v2117 = vsel %vm360, %v2108, %v2110
    %v2118 = vsel %vm360, %v2110, %v2112
    %v2119 = vsel %vm360, %v2112, %v2114
    %v2120 = vsel %vm360, %v2114, %v2116
    %2125 = vst [vmem:[#allocation3 + $0xa0] sm:$0xf] %v2117
    %2126 = vst [vmem:[#allocation3 + $0xa8] sm:$0xf] %v2118
    %2127 = vst [vmem:[#allocation3 + $0xb0] sm:$0xf] %v2119
    %2128 = vst [vmem:[#allocation3 + $0xb8] sm:$0xf] %v2120
    %v2129 = vld [vmem:[#allocation2 + $0x8] sm:$0xf]
    %v2130 = vld [vmem:[#allocation2 + $0x10] sm:$0xf]
    %v2131 = vld [vmem:[#allocation2 + $0x18] sm:$0xf]
    %v2132 = vld [vmem:[#allocation2 + $0x20] sm:$0xf]
    %v2133 = vld [vmem:[#allocation2 + $0x28] sm:$0xf]
    %v2134 = vld [vmem:[%s487] ss:$8 sm:$0xf]
    %v2136 = vlaneseq
    %v2137 = vshrl.u32 %v2136, 7
    %v2138 = vsub.s32 0, %v2137
    %v2139 = vrot.slane %v2134, %v2138
    %v2140 = vlaneseq
    %v2141 = vshrl.u32 %v2140, 7
    %v2142 = vsub.s32 1, %v2141
    %v2143 = vrot.slane %v2134, %v2142
    %v2144 = vlaneseq
    %v2145 = vshrl.u32 %v2144, 7
    %v2146 = vsub.s32 2, %v2145
    %v2147 = vrot.slane %v2134, %v2146
    %v2148 = vlaneseq
    %v2149 = vshrl.u32 %v2148, 7
    %v2150 = vsub.s32 3, %v2149
    %v2151 = vrot.slane %v2134, %v2150
    %2152 = vrot.lane.b32.xlu0 %v2139, 15
    %v2153 = vpop.permute.xlu0 %2152
    %2154 = vrot.lane.b32.xlu0 %v2143, 15
    %v2155 = vpop.permute.xlu0 %2154
    %2156 = vrot.lane.b32.xlu0 %v2147, 15
    %v2157 = vpop.permute.xlu0 %2156
    %2158 = vrot.lane.b32.xlu0 %v2151, 15
    %v2159 = vpop.permute.xlu0 %2158
    %v2160 = vsel %vm315, %v2153, %v2155
    %v2161 = vsel %vm315, %v2155, %v2157
    %v2162 = vsel %vm315, %v2157, %v2159
    %v2168 = vmul.f32 %v2129, %v2153
    %v2169 = vmul.f32 %v2130, %v2160
    %v2170 = vmul.f32 %v2131, %v2161
    %v2171 = vmul.f32 %v2132, %v2162
    %v2172 = vmul.f32 %v2133, %v2159
    %2178 = vrot.lane.b32.xlu0 %v2168, 113
    %v2179 = vpop.permute.xlu0 %2178
    %2180 = vrot.lane.b32.xlu0 %v2169, 113
    %v2181 = vpop.permute.xlu0 %2180
    %2182 = vrot.lane.b32.xlu0 %v2170, 113
    %v2183 = vpop.permute.xlu0 %2182
    %2184 = vrot.lane.b32.xlu0 %v2171, 113
    %v2185 = vpop.permute.xlu0 %2184
    %2186 = vrot.lane.b32.xlu0 %v2172, 113
    %v2187 = vpop.permute.xlu0 %2186
    %v2188 = vsel %vm286, %v2179, %v2181
    %v2189 = vsel %vm286, %v2181, %v2183
    %v2190 = vsel %vm286, %v2183, %v2185
    %v2191 = vsel %vm286, %v2185, %v2187
    %2196 = vst [vmem:[#allocation3 + $0xc0] sm:$0xf] %v2188
    %2197 = vst [vmem:[#allocation3 + $0xc8] sm:$0xf] %v2189
    %2198 = vst [vmem:[#allocation3 + $0xd0] sm:$0xf] %v2190
    %2199 = vst [vmem:[#allocation3 + $0xd8] sm:$0xf] %v2191
    %v2200 = vld [vmem:[#allocation2 + $0x8] sm:$0xf]
    %v2201 = vld [vmem:[#allocation2 + $0x10] sm:$0xf]
    %v2202 = vld [vmem:[#allocation2 + $0x18] sm:$0xf]
    %v2203 = vld [vmem:[#allocation2 + $0x20] sm:$0xf]
    %v2204 = vld [vmem:[#allocation2 + $0x28] sm:$0xf]
    %v2205 = vld [vmem:[%s559] ss:$8 sm:$0xf]
    %v2207 = vlaneseq
    %v2208 = vshrl.u32 %v2207, 7
    %v2209 = vsub.s32 0, %v2208
    %v2210 = vrot.slane %v2205, %v2209
    %v2211 = vlaneseq
    %v2212 = vshrl.u32 %v2211, 7
    %v2213 = vsub.s32 1, %v2212
    %v2214 = vrot.slane %v2205, %v2213
    %v2215 = vlaneseq
    %v2216 = vshrl.u32 %v2215, 7
    %v2217 = vsub.s32 2, %v2216
    %v2218 = vrot.slane %v2205, %v2217
    %v2219 = vlaneseq
    %v2220 = vshrl.u32 %v2219, 7
    %v2221 = vsub.s32 3, %v2220
    %v2222 = vrot.slane %v2205, %v2221
    %2223 = vrot.lane.b32.xlu0 %v2210, 16
    %v2224 = vpop.permute.xlu0 %2223
    %2225 = vrot.lane.b32.xlu0 %v2214, 16
    %v2226 = vpop.permute.xlu0 %2225
    %2227 = vrot.lane.b32.xlu0 %v2218, 16
    %v2228 = vpop.permute.xlu0 %2227
    %2229 = vrot.lane.b32.xlu0 %v2222, 16
    %v2230 = vpop.permute.xlu0 %2229
    %v2231 = vsel %vm241, %v2224, %v2226
    %v2232 = vsel %vm241, %v2226, %v2228
    %v2233 = vsel %vm241, %v2228, %v2230
    %v2239 = vmul.f32 %v2200, %v2224
    %v2240 = vmul.f32 %v2201, %v2231
    %v2241 = vmul.f32 %v2202, %v2232
    %v2242 = vmul.f32 %v2203, %v2233
    %v2243 = vmul.f32 %v2204, %v2230
    %2249 = vrot.lane.b32.xlu0 %v2239, 112
    %v2250 = vpop.permute.xlu0 %2249
    %2251 = vrot.lane.b32.xlu0 %v2240, 112
    %v2252 = vpop.permute.xlu0 %2251
    %2253 = vrot.lane.b32.xlu0 %v2241, 112
    %v2254 = vpop.permute.xlu0 %2253
    %2255 = vrot.lane.b32.xlu0 %v2242, 112
    %v2256 = vpop.permute.xlu0 %2255
    %2257 = vrot.lane.b32.xlu0 %v2243, 112
    %v2258 = vpop.permute.xlu0 %2257
    %v2259 = vsel %vm212, %v2250, %v2252
    %v2260 = vsel %vm212, %v2252, %v2254
    %v2261 = vsel %vm212, %v2254, %v2256
    %v2262 = vsel %vm212, %v2256, %v2258
    %2267 = vst [vmem:[#allocation3 + $0xe0] sm:$0xf] %v2259
    %2268 = vst [vmem:[#allocation3 + $0xe8] sm:$0xf] %v2260
    %2269 = vst [vmem:[#allocation3 + $0xf0] sm:$0xf] %v2261
    %2270 = vst [vmem:[#allocation3 + $0xf8] sm:$0xf] %v2262
    %v2271 = vld [vmem:[#allocation2 + $0x8] sm:$0xf]
    %v2272 = vld [vmem:[#allocation2 + $0x10] sm:$0xf]
    %v2273 = vld [vmem:[#allocation2 + $0x18] sm:$0xf]
    %v2274 = vld [vmem:[#allocation2 + $0x20] sm:$0xf]
    %v2275 = vld [vmem:[#allocation2 + $0x28] sm:$0xf]
    %v2276 = vld [vmem:[%s631] ss:$8 sm:$0xf]
    %v2278 = vlaneseq
    %v2279 = vshrl.u32 %v2278, 7
    %v2280 = vsub.s32 0, %v2279
    %v2281 = vrot.slane %v2276, %v2280
    %v2282 = vlaneseq
    %v2283 = vshrl.u32 %v2282, 7
    %v2284 = vsub.s32 1, %v2283
    %v2285 = vrot.slane %v2276, %v2284
    %v2286 = vlaneseq
    %v2287 = vshrl.u32 %v2286, 7
    %v2288 = vsub.s32 2, %v2287
    %v2289 = vrot.slane %v2276, %v2288
    %v2290 = vlaneseq
    %v2291 = vshrl.u32 %v2290, 7
    %v2292 = vsub.s32 3, %v2291
    %v2293 = vrot.slane %v2276, %v2292
    %2294 = vrot.lane.b32.xlu0 %v2281, 17
    %v2295 = vpop.permute.xlu0 %2294
    %2296 = vrot.lane.b32.xlu0 %v2285, 17
    %v2297 = vpop.permute.xlu0 %2296
    %2298 = vrot.lane.b32.xlu0 %v2289, 17
    %v2299 = vpop.permute.xlu0 %2298
    %2300 = vrot.lane.b32.xlu0 %v2293, 17
    %v2301 = vpop.permute.xlu0 %2300
    %v2302 = vsel %vm167, %v2295, %v2297
    %v2303 = vsel %vm167, %v2297, %v2299
    %v2304 = vsel %vm167, %v2299, %v2301
    %v2310 = vmul.f32 %v2271, %v2295
    %v2311 = vmul.f32 %v2272, %v2302
    %v2312 = vmul.f32 %v2273, %v2303
    %v2313 = vmul.f32 %v2274, %v2304
    %v2314 = vmul.f32 %v2275, %v2301
    %2320 = vrot.lane.b32.xlu0 %v2310, 111
    %v2321 = vpop.permute.xlu0 %2320
    %2322 = vrot.lane.b32.xlu0 %v2311, 111
    %v2323 = vpop.permute.xlu0 %2322
    %2324 = vrot.lane.b32.xlu0 %v2312, 111
    %v2325 = vpop.permute.xlu0 %2324
    %2326 = vrot.lane.b32.xlu0 %v2313, 111
    %v2327 = vpop.permute.xlu0 %2326
    %2328 = vrot.lane.b32.xlu0 %v2314, 111
    %v2329 = vpop.permute.xlu0 %2328
    %v2330 = vsel %vm138, %v2321, %v2323
    %v2331 = vsel %vm138, %v2323, %v2325
    %v2332 = vsel %vm138, %v2325, %v2327
    %v2333 = vsel %vm138, %v2327, %v2329
    %2338 = vst [vmem:[#allocation3 + $0x100] sm:$0xf] %v2330
    %2339 = vst [vmem:[#allocation3 + $0x108] sm:$0xf] %v2331
    %2340 = vst [vmem:[#allocation3 + $0x110] sm:$0xf] %v2332
    %2341 = vst [vmem:[#allocation3 + $0x118] sm:$0xf] %v2333
    %v2342 = vld [vmem:[%s8] sm:$0xff]
    %v2343 = vld [vmem:[#allocation3] sm:$0xff]
    %v2344 = vld [vmem:[#allocation3 + $0x8] sm:$0xff]
    %v2345 = vld [vmem:[#allocation3 + $0x10] sm:$0xff]
    %v2346 = vld [vmem:[#allocation3 + $0x18] sm:$0xff]
    %v2347 = vld [vmem:[#allocation3 + $0x20] sm:$0xff]
    %v2348 = vld [vmem:[#allocation3 + $0x28] sm:$0xff]
    %v2349 = vld [vmem:[#allocation3 + $0x30] sm:$0xff]
    %v2350 = vld [vmem:[#allocation3 + $0x38] sm:$0xff]
    %v2351 = vld [vmem:[#allocation3 + $0x40] sm:$0xff]
    %v2352 = vld [vmem:[#allocation3 + $0x48] sm:$0xff]
    %v2353 = vld [vmem:[#allocation3 + $0x50] sm:$0xff]
    %v2354 = vld [vmem:[#allocation3 + $0x58] sm:$0xff]
    %v2355 = vld [vmem:[#allocation3 + $0x60] sm:$0xff]
    %v2356 = vld [vmem:[#allocation3 + $0x68] sm:$0xff]
    %v2357 = vld [vmem:[#allocation3 + $0x70] sm:$0xff]
    %v2358 = vld [vmem:[#allocation3 + $0x78] sm:$0xff]
    %v2359 = vld [vmem:[#allocation3 + $0x80] sm:$0xff]
    %v2360 = vld [vmem:[#allocation3 + $0x88] sm:$0xff]
    %v2361 = vld [vmem:[#allocation3 + $0x90] sm:$0xff]
    %v2362 = vld [vmem:[#allocation3 + $0x98] sm:$0xff]
    %v2363 = vld [vmem:[#allocation3 + $0xa0] sm:$0xff]
    %v2364 = vld [vmem:[#allocation3 + $0xa8] sm:$0xff]
    %v2365 = vld [vmem:[#allocation3 + $0xb0] sm:$0xff]
    %v2366 = vld [vmem:[#allocation3 + $0xb8] sm:$0xff]
    %v2367 = vld [vmem:[#allocation3 + $0xc0] sm:$0xff]
    %v2368 = vld [vmem:[#allocation3 + $0xc8] sm:$0xff]
    %v2369 = vld [vmem:[#allocation3 + $0xd0] sm:$0xff]
    %v2370 = vld [vmem:[#allocation3 + $0xd8] sm:$0xff]
    %v2371 = vld [vmem:[#allocation3 + $0xe0] sm:$0xff]
    %v2372 = vld [vmem:[#allocation3 + $0xe8] sm:$0xff]
    %v2373 = vld [vmem:[#allocation3 + $0xf0] sm:$0xff]
    %v2374 = vld [vmem:[#allocation3 + $0xf8] sm:$0xff]
    %v2375 = vld [vmem:[#allocation3 + $0x100] sm:$0xff]
    %v2376 = vld [vmem:[#allocation3 + $0x108] sm:$0xff]
    %v2377 = vld [vmem:[#allocation3 + $0x110] sm:$0xff]
    %v2378 = vld [vmem:[#allocation3 + $0x118] sm:$0xff]
    %v2380 = vsel %vm735, %v2342, 0
    %2382 = vmatprep.subr.mxu0 %v2344
    %2383 = vmatpush1.msra.mxu0 %v2343
    %2384 = vmatprep.subr.mxu0 %v2348
    %2385 = vmatpush1.msra.mxu0 %v2347
    %2386 = vmatprep.subr.mxu0 %v2352
    %2387 = vmatpush1.msra.mxu0 %v2351
    %2388 = vmatprep.subr.mxu0 %v2356
    %2389 = vmatpush1.msra.mxu0 %v2355
    %2390 = vmatprep.subr.mxu0 %v2360
    %2391 = vmatpush1.msra.mxu0 %v2359
    %2392 = vmatprep.subr.mxu0 %v2364
    %2393 = vmatpush1.msra.mxu0 %v2363
    %2394 = vmatprep.subr.mxu0 %v2368
    %2395 = vmatpush1.msra.mxu0 %v2367
    %2396 = vmatprep.subr.mxu0 %v2372
    %2397 = vmatpush1.msra.mxu0 %v2371
    %2398 = vmatprep.subr.mxu0 %v2376
    %2399 = vmatpush1.msra.mxu0 %v2375
    %2400 = vmatprep.subr.mxu0 0.0
    %2401 = vmatpush1.msra.mxu0 0.0
    %2402 = vmatprep.subr.mxu0 0.0
    %2403 = vmatpush1.msra.mxu0 0.0
    %2404 = vmatprep.subr.mxu0 0.0
    %2405 = vmatpush1.msra.mxu0 0.0
    %2406 = vmatprep.subr.mxu0 0.0
    %2407 = vmatpush1.msra.mxu0 0.0
    %2408 = vmatprep.subr.mxu0 0.0
    %2409 = vmatpush1.msra.mxu0 0.0
    %2410 = vmatprep.subr.mxu0 0.0
    %2411 = vmatpush1.msra.mxu0 0.0
    %2412 = vmatprep.subr.mxu0 0.0
    %2413 = vmatpush1.msra.mxu0 0.0
    %2414 = vmatprep.subr.mxu0 0.0
    %2415 = vmatpush1.msra.mxu0 0.0
    %2416 = vmatprep.subr.mxu0 0.0
    %2417 = vmatpush1.msra.mxu0 0.0
    %2418 = vmatprep.subr.mxu0 0.0
    %2419 = vmatpush1.msra.mxu0 0.0
    %2420 = vmatprep.subr.mxu0 0.0
    %2421 = vmatpush1.msra.mxu0 0.0
    %2422 = vmatprep.subr.mxu0 0.0
    %2423 = vmatpush1.msra.mxu0 0.0
    %2424 = vmatprep.subr.mxu0 0.0
    %2425 = vmatpush1.msra.mxu0 0.0
    %2426 = vmatprep.subr.mxu0 0.0
    %2427 = vmatpush1.msra.mxu0 0.0
    %2428 = vmatprep.subr.mxu0 0.0
    %2429 = vmatpush1.msra.mxu0 0.0
    %2430 = vmatprep.subr.mxu0 0.0
    %2431 = vmatpush1.msra.mxu0 0.0
    %2432 = vmatprep.subr.mxu0 0.0
    %2433 = vmatpush1.msra.mxu0 0.0
    %2434 = vmatprep.subr.mxu0 0.0
    %2435 = vmatpush1.msra.mxu0 0.0
    %2436 = vmatprep.subr.mxu0 0.0
    %2437 = vmatpush1.msra.mxu0 0.0
    %2438 = vmatprep.subr.mxu0 0.0
    %2439 = vmatpush1.msra.mxu0 0.0
    %2440 = vmatprep.subr.mxu0 0.0
    %2441 = vmatpush1.msra.mxu0 0.0
    %2442 = vmatprep.subr.mxu0 0.0
    %2443 = vmatpush1.msra.mxu0 0.0
    %2444 = vmatprep.subr.mxu0 0.0
    %2445 = vmatpush1.msra.mxu0 0.0
    %2446 = vmatprep.mubr.f32.mxu0 0.0
    %2447 = vmatmul.mubr.f32.gmra.mrb[0].mxu0 %v2380
    %v2448 = vpop.f32.mrb[0].mxu0
    %v2449 = vadd.f32 0.0, %v2448
    %v2450 = vpop.f32.mrb[0].mxu0
    %v2451 = vadd.f32 0.0, %v2450
    %2452 = vdwg.mxu0
    %2453 = vmatprep.subr.mxu0 %v2346
    %2454 = vmatpush1.msra.mxu0 %v2345
    %2455 = vmatprep.subr.mxu0 %v2350
    %2456 = vmatpush1.msra.mxu0 %v2349
    %2457 = vmatprep.subr.mxu0 %v2354
    %2458 = vmatpush1.msra.mxu0 %v2353
    %2459 = vmatprep.subr.mxu0 %v2358
    %2460 = vmatpush1.msra.mxu0 %v2357
    %2461 = vmatprep.subr.mxu0 %v2362
    %2462 = vmatpush1.msra.mxu0 %v2361
    %2463 = vmatprep.subr.mxu0 %v2366
    %2464 = vmatpush1.msra.mxu0 %v2365
    %2465 = vmatprep.subr.mxu0 %v2370
    %2466 = vmatpush1.msra.mxu0 %v2369
    %2467 = vmatprep.subr.mxu0 %v2374
    %2468 = vmatpush1.msra.mxu0 %v2373
    %2469 = vmatprep.subr.mxu0 %v2378
    %2470 = vmatpush1.msra.mxu0 %v2377
    %2471 = vmatprep.subr.mxu0 0.0
    %2472 = vmatpush1.msra.mxu0 0.0
    %2473 = vmatprep.subr.mxu0 0.0
    %2474 = vmatpush1.msra.mxu0 0.0
    %2475 = vmatprep.subr.mxu0 0.0
    %2476 = vmatpush1.msra.mxu0 0.0
    %2477 = vmatprep.subr.mxu0 0.0
    %2478 = vmatpush1.msra.mxu0 0.0
    %2479 = vmatprep.subr.mxu0 0.0
    %2480 = vmatpush1.msra.mxu0 0.0
    %2481 = vmatprep.subr.mxu0 0.0
    %2482 = vmatpush1.msra.mxu0 0.0
    %2483 = vmatprep.subr.mxu0 0.0
    %2484 = vmatpush1.msra.mxu0 0.0
    %2485 = vmatprep.subr.mxu0 0.0
    %2486 = vmatpush1.msra.mxu0 0.0
    %2487 = vmatprep.subr.mxu0 0.0
    %2488 = vmatpush1.msra.mxu0 0.0
    %2489 = vmatprep.subr.mxu0 0.0
    %2490 = vmatpush1.msra.mxu0 0.0
    %2491 = vmatprep.subr.mxu0 0.0
    %2492 = vmatpush1.msra.mxu0 0.0
    %2493 = vmatprep.subr.mxu0 0.0
    %2494 = vmatpush1.msra.mxu0 0.0
    %2495 = vmatprep.subr.mxu0 0.0
    %2496 = vmatpush1.msra.mxu0 0.0
    %2497 = vmatprep.subr.mxu0 0.0
    %2498 = vmatpush1.msra.mxu0 0.0
    %2499 = vmatprep.subr.mxu0 0.0
    %2500 = vmatpush1.msra.mxu0 0.0
    %2501 = vmatprep.subr.mxu0 0.0
    %2502 = vmatpush1.msra.mxu0 0.0
    %2503 = vmatprep.subr.mxu0 0.0
    %2504 = vmatpush1.msra.mxu0 0.0
    %2505 = vmatprep.subr.mxu0 0.0
    %2506 = vmatpush1.msra.mxu0 0.0
    %2507 = vmatprep.subr.mxu0 0.0
    %2508 = vmatpush1.msra.mxu0 0.0
    %2509 = vmatprep.subr.mxu0 0.0
    %2510 = vmatpush1.msra.mxu0 0.0
    %2511 = vmatprep.subr.mxu0 0.0
    %2512 = vmatpush1.msra.mxu0 0.0
    %2513 = vmatprep.subr.mxu0 0.0
    %2514 = vmatpush1.msra.mxu0 0.0
    %2515 = vmatprep.subr.mxu0 0.0
    %2516 = vmatpush1.msra.mxu0 0.0
    %2517 = vmatprep.mubr.f32.mxu0 0.0
    %2518 = vmatmul.mubr.f32.gmra.mrb[0].mxu0 %v2380
    %v2519 = vpop.f32.mrb[0].mxu0
    %v2520 = vadd.f32 0.0, %v2519
    %v2521 = vpop.f32.mrb[0].mxu0
    %v2522 = vadd.f32 0.0, %v2521
    %2523 = vdwg.mxu0
    %v2524 = vadd.f32 %v2449, %v2451
    %v2525 = vadd.f32 %v2524, %v2520
    %v2526 = vadd.f32 %v2525, %v2522
    %2527 = vadd.xlane.f32.xlu0 %v2526
    %v2528 = vpop.xlane.xlu0 %2527
    %v2529 = vmul.f32 %v2528, 0.001953125
    %v2530 = vmul.f32 %v2449, %v2449
    %v2531 = vmul.f32 %v2451, %v2451
    %v2532 = vmul.f32 %v2520, %v2520
    %v2533 = vmul.f32 %v2522, %v2522
    %v2534 = vadd.f32 %v2530, %v2531
    %v2535 = vadd.f32 %v2534, %v2532
    %v2536 = vadd.f32 %v2535, %v2533
    %2537 = vadd.xlane.f32.xlu0 %v2536
    %v2538 = vpop.xlane.xlu0 %2537
    %v2539 = vmul.f32 %v2538, 0.001953125
    %v2540 = vmul.f32 %v2529, %v2529
    %v2541 = vsub.f32 %v2539, %v2540
    %v2542 = vld [vmem:[%s9] sm:$0xff]
    %v2543 = vadd.f32 %v2541, 1e-05
    %v2544 = vrsqrt.pop %v2543
    %v2545 = vmul.f32 %v2542, %v2544
    %v2546 = vld [vmem:[%s10] sm:$0xff]
    %v2547 = vmul.f32 %v2529, %v2545
    %v2548 = vsub.f32 %v2546, %v2547
    %2550 = vset.pattern.permute.xlu0 0
    %2551 = vperm.xlu0 %2550, %v2545
    %v2552 = vpop.permute.xlu0 %2551
    %v2554 = vmul.f32 %v2449, %v2552
    %v2555 = vmul.f32 %v2451, %v2552
    %v2556 = vmul.f32 %v2520, %v2552
    %v2557 = vmul.f32 %v2522, %v2552
    %2559 = vset.pattern.permute.xlu0 0
    %2560 = vperm.xlu0 %2559, %v2548
    %v2561 = vpop.permute.xlu0 %2560
    %v2563 = vadd.f32 %v2554, %v2561
    %v2564 = vadd.f32 %v2555, %v2561
    %v2565 = vadd.f32 %v2556, %v2561
    %v2566 = vadd.f32 %v2557, %v2561
    %vm2567 = vcmp.gt.f32.partialorder %v2563, 0.0
    %vm2568 = vcmp.gt.f32.partialorder %v2564, 0.0
    %vm2569 = vcmp.gt.f32.partialorder %v2565, 0.0
    %vm2570 = vcmp.gt.f32.partialorder %v2566, 0.0
    %v2571 = vmul.f32 %v2563, 0.2
    %v2572 = vmul.f32 %v2564, 0.2
    %v2573 = vmul.f32 %v2565, 0.2
    %v2574 = vmul.f32 %v2566, 0.2
    %v2575 = vsel %vm2567, %v2563, %v2571
    %v2576 = vsel %vm2568, %v2564, %v2572
    %v2577 = vsel %vm2569, %v2565, %v2573
    %v2578 = vsel %vm2570, %v2566, %v2574
    %2579 = vst [vmem:[#allocation7] sm:$0xff] %v2575
    %2580 = vst [vmem:[#allocation7 + $0x8] sm:$0xff] %v2576
    %2581 = vst [vmem:[#allocation7 + $0x10] sm:$0xff] %v2577
    %2582 = vst [vmem:[#allocation7 + $0x18] sm:$0xff] %v2578
    // Predicated region
    $region50: #{tpu_custom_call.1} parent=1 // pred_check
      _
    $region51: #{tpu_custom_call.1} parent=1 // pred_check_branch
      %2584 = sbr.rel (0) target = $region53
    $region52: #{tpu_custom_call.1} parent=1 // pred_region
      %s2586 = ssub.s32 512, 512
      %2587 = vsyncadd [#allocation6], %s2586
      %s2589 = sshll.u32 [#allocation7], 4
      %s2590 = int_to_ptr.vmem [resolvable:$true] %s2589
      %2592 = dma.vmem_to_hbm [thread:$0]  %s2590, 512, %s11, [#allocation6]
    $region53: #{tpu_custom_call.1} parent=1 // pred_fallthru
      _
    // Predicated region
    $region54: #{tpu_custom_call.1} parent=1 // pred_check
      _
    $region55: #{tpu_custom_call.1} parent=1 // pred_check_branch
      %2594 = sbr.rel (0) target = $region57
    $region56: #{tpu_custom_call.1} parent=1 // pred_region
      %2595 = dma.done [#allocation6], 512
    $region57: #{tpu_custom_call.1} parent=1 // pred_fallthru
      _
    %2596 = vsyncpa [#allocation5], 1
    %2597 = vsyncpa [#allocation6], 1

</llo_original>
